<compile_context>
chip_gen: v5e
topology: v5e:2x2
jax: 0.10.0
libtpu: 0.0.40
codegen_flags: <defaults>
</compile_context>

<pallas_src>
import functools

import jax
import jax.numpy as jnp
from jax import lax
from jax.experimental import pallas as pl
from jax.experimental.pallas import tpu as pltpu

_NBINS = 512    # den-quantile levels (halved from 1024; error bound stays << 1e-3)
_LANES = 128    # lane width / chunk size for the prefix-count matmuls


def _self_training_kernel(x_ref, out_ref,
                          cum_ref, bstar_ref, r_ref, carry_ref,
                          den_c_ref, lab_c_ref, acc_ref,
                          *, C, TN, nbins, num_tiles, n_valid,
                          inv_conf, fraction, use_conf, use_topk):
    p = pl.program_id(1)        # phase: 0 = histogram (topk only), last = loss
    nt = pl.program_id(2)       # spatial tile index
    loss_phase = 1 if use_topk else 0
    has_pad = n_valid < num_tiles * TN

    cls_iota = lax.broadcasted_iota(jnp.int32, (C, TN), 0)
    scale = jnp.float32(float(nbins) / float(max(C - 1, 1)))

    if has_pad:
        lane_io = lax.broadcasted_iota(jnp.int32, (1, TN), 1)
        valid = (nt * TN + lane_io) < n_valid                    # (1, TN) bool
    else:
        valid = None

    def softmax_stats():
        x = x_ref[0].astype(jnp.float32)                         # (C, TN), pixels on lanes
        m_r = jnp.max(x, axis=0, keepdims=True)                  # (1, TN)
        den_r = jnp.sum(jnp.exp(x - m_r), axis=0, keepdims=True)  # (1, TN); den in [1, C]
        pseudo_r = jnp.min(jnp.where(x == m_r, cls_iota, C),
                           axis=0, keepdims=True)                # first-argmax label
        return den_r, pseudo_r

    def bin_of(den_r):
        # bin = floor((den - 1) * nbins / (C - 1)), clipped to [0, nbins-1]
        return jnp.clip((den_r - jnp.float32(1.0)) * scale,
                        jnp.float32(0.0), jnp.float32(nbins - 1)).astype(jnp.int32)

    def class_onehot(pseudo_r):
        oh = cls_iota == pseudo_r
        if has_pad:
            oh = oh & valid                # padded pixels never count as any class
        return oh.astype(jnp.float32)

    # ------------- phase 0 (topk only): per-class cumulative den-histogram -------
    if use_topk:
        @pl.when(p == 0)
        def _():
            den_r, pseudo_r = softmax_stats()
            # cache per-pixel softmax denom + label so the loss phase never re-reads
            # the logits or re-runs exp()
            den_c_ref[pl.ds(nt, 1), :] = den_r
            lab_c_ref[pl.ds(nt, 1), :] = pseudo_r
            class_oh = class_onehot(pseudo_r)
            bin_r = bin_of(den_r)                                        # (1, TN) int32
            t_io = lax.broadcasted_iota(jnp.int32, (nbins, TN), 0)
            ge = (t_io >= bin_r).astype(jnp.float32)    # single compare mask build

            @pl.when(nt == 0)
            def _():
                cum_ref[...] = jnp.zeros_like(cum_ref)

            # cum[c, t] += #{pixels: class c, bin <= t}; contraction over pixels.
            # TODO(synk): keep f32 operands + ((1,),(1,)) dims (known-good lowering);
            # switch to bf16 / (TN,nbins) orientation once verified on the MLIR dump.
            cum_ref[...] += lax.dot_general(
                class_oh, ge, (((1,), (1,)), ((), ())),
                preferred_element_type=jnp.float32)

        # ---- loss phase, first tile: derive per-class boundary level + slots ----
        @pl.when((p == loss_phase) & (nt == 0))
        def _():
            cum = cum_ref[...]                                           # (C, nbins)
            count_c = cum[:, nbins - 1:nbins]                            # (C, 1)
            k_c = jnp.floor(count_c * jnp.float32(fraction))             # int(cnt*frac)
            t_f = lax.broadcasted_iota(jnp.int32, (C, nbins), 1).astype(jnp.float32)
            hit = cum >= k_c
            bstar = jnp.min(jnp.where(hit, t_f, jnp.float32(nbins)),
                            axis=1, keepdims=True)                       # (C, 1)
            n_strict = jnp.sum(jnp.where(t_f == bstar - 1.0, cum, 0.0),
                               axis=1, keepdims=True)                    # (C, 1)
            bstar_ref[...] = bstar
            r_ref[...] = k_c - n_strict      # boundary slots, filled in index order
            carry_ref[...] = jnp.zeros_like(carry_ref)

    # ------------------- loss phase: mask pixels + accumulate CE -----------------
    @pl.when(p == loss_phase)
    def _():
        if use_topk:
            den_r = den_c_ref[pl.ds(nt, 1), :]                           # cached
            pseudo_r = lab_c_ref[pl.ds(nt, 1), :]
        else:
            den_r, pseudo_r = softmax_stats()
        logden_r = jnp.log(den_r)            # CE(pred, argmax) per pixel

        if use_conf:
            keep = den_r < jnp.float32(inv_conf)        # max softmax prob > conf_th
        else:
            keep = jnp.zeros((1, TN), dtype=jnp.bool_)

        if use_topk:
            class_oh = class_onehot(pseudo_r)
            bin_f = bin_of(den_r).astype(jnp.float32)                    # (1, TN)
            # gather this pixel's class boundary level via the one-hot labels
            bstar_p = jnp.sum(class_oh * bstar_ref[...], axis=0, keepdims=True)
            keep = keep | (bin_f < bstar_p)             # strictly below the boundary
        if has_pad:
            keep = keep & valid

        tile_sum = jnp.sum(jnp.where(keep, logden_r, jnp.float32(0.0)),
                           axis=1, keepdims=True)                        # (1, 1)

        if use_topk:
            # Boundary-bin tie refinement: take the first r_c same-class boundary
            # pixels in pixel-index order.  Exclusive prefix counts per 128-lane
            # chunk via bf16 strict-lower-triangular matmuls + per-class carries
            # (replaces the old O(TN^2) triangular matmul).
            boundary = bin_f == bstar_p
            flags = class_oh * boundary.astype(jnp.float32)              # (C, TN) 0/1
            ii = lax.broadcasted_iota(jnp.int32, (_LANES, _LANES), 0)
            jj = lax.broadcasted_iota(jnp.int32, (_LANES, _LANES), 1)
            lt = (ii < jj).astype(jnp.bfloat16)          # "earlier pixel" matrix
            carry = carry_ref[...]                                       # (C, 1)
            r_c = r_ref[...]                                             # (C, 1)
            for j in range(TN // _LANES):
                sl = slice(j * _LANES, (j + 1) * _LANES)
                fj = flags[:, sl]                                        # (C, 128)
                prefix = jnp.dot(fj.astype(jnp.bfloat16), lt,
                                 preferred_element_type=jnp.float32)     # exclusive
                pos = prefix + carry
                sel_j = jnp.sum(fj * (pos < r_c).astype(jnp.float32),
                                axis=0, keepdims=True) > jnp.float32(0.0)  # (1, 128)
                extra_j = sel_j & jnp.logical_not(keep[:, sl])
                tile_sum = tile_sum + jnp.sum(
                    jnp.where(extra_j, logden_r[:, sl], jnp.float32(0.0)),
                    axis=1, keepdims=True)
                carry = carry + jnp.sum(fj, axis=1, keepdims=True)
            carry_ref[...] = carry

        @pl.when(nt == 0)
        def _():
            acc_ref[...] = jnp.zeros_like(acc_ref)
        acc_ref[...] += tile_sum

        # single lane-dense store of the per-image loss at the last tile
        @pl.when(nt == pl.num_programs(2) - 1)
        def _():
            out_ref[...] = jnp.broadcast_to(acc_ref[...], (1, 1, _LANES))


def self_training_loss(pred, *, conf_th=0.9, fraction=0.66, ignore_index=255,
                       lambda_selftrain=1.0, tile_n=None, nbins=_NBINS):
    """Equivalent of SelfTrainingLoss.forward(pred) with teacher=None."""
    B, C, H, W = pred.shape
    N = H * W
    x = pred.reshape(B, C, N)      # native dtype; the kernel upcasts to f32 in VMEM

    if tile_n is None:
        # largest lane-aligned tile dividing N (per-tile work is now linear in TN,
        # so bigger tiles just amortize the fixed grid-step cost)
        for cand in (2048, 1024, 512, 256, 128):
            if N % cand == 0:
                tile_n = cand
                break
        else:
            tile_n = 512 if N >= 512 else 128     # awkward sizes: pad instead
    assert tile_n % _LANES == 0, "tile_n must be a multiple of 128"
    n_pad = -(-N // tile_n) * tile_n
    if n_pad != N:
        # padded pixels are excluded from class counts / conf mask / loss in-kernel
        x = jnp.pad(x, ((0, 0), (0, 0), (0, n_pad - N)))
    num_tiles = n_pad // tile_n

    use_conf = 0.0 < conf_th < 1.0
    use_topk = 0.0 < fraction < 1.0
    n_phase = 2 if use_topk else 1
    cache_rows = num_tiles if use_topk else 1

    kern = functools.partial(
        _self_training_kernel, C=C, TN=tile_n, nbins=nbins, num_tiles=num_tiles,
        n_valid=N, inv_conf=(1.0 / conf_th) if use_conf else 0.0,
        fraction=float(fraction), use_conf=use_conf, use_topk=use_topk)

    # Right-sized VMEM budget (v7x has only 64 MiB physical per TensorCore).
    itemsize = jnp.dtype(x.dtype).itemsize
    vmem_bytes = (2 * C * tile_n * itemsize            # double-buffered input block
                  + 3 * nbins * tile_n * 4             # phase-0 iota/mask temporaries
                  + 16 * C * tile_n * 4                # per-tile (C, TN) temporaries
                  + cache_rows * tile_n * 8            # den + pseudo-label caches
                  + C * nbins * 4                      # cumulative histogram
                  + (12 << 20))                        # headroom for compiler temps
    vmem_bytes = int(min(100 << 20, max(16 << 20, vmem_bytes)))

    per_image = pl.pallas_call(
        kern,
        out_shape=jax.ShapeDtypeStruct((B, 1, _LANES), jnp.float32),
        grid_spec=pltpu.PrefetchScalarGridSpec(
            num_scalar_prefetch=0,
            grid=(B, n_phase, num_tiles),
            # pin the input block in the loss phase so x is not re-DMA'd there
            in_specs=[pl.BlockSpec(
                (1, C, tile_n),
                lambda b, p, t, _last=num_tiles - 1: (b, 0, t * (1 - p) + p * _last))],
            out_specs=pl.BlockSpec((1, 1, _LANES), lambda b, p, t: (b, 0, 0)),
            scratch_shapes=[
                pltpu.VMEM((C, nbins), jnp.float32),          # cumulative histogram
                pltpu.VMEM((C, 1), jnp.float32),              # bstar (boundary level)
                pltpu.VMEM((C, 1), jnp.float32),              # r_c   (boundary slots)
                pltpu.VMEM((C, 1), jnp.float32),              # carry (boundary seen)
                pltpu.VMEM((cache_rows, tile_n), jnp.float32),  # den cache
                pltpu.VMEM((cache_rows, tile_n), jnp.int32),    # pseudo-label cache
                pltpu.VMEM((1, 1), jnp.float32),              # per-image loss acc
            ]),
        compiler_params=pltpu.CompilerParams(
            dimension_semantics=("parallel", "arbitrary", "arbitrary"),
            vmem_limit_bytes=vmem_bytes),
    )(x)

    # ignore_index only relabels masked-out pixels; with reduction='none' their loss
    # is exactly 0, so it never enters the kernel computation.
    del ignore_index
    total = jnp.sum(per_image[:, 0, 0])
    return (total / jnp.float32(B * N)) * jnp.float32(lambda_selftrain)


def _reference_loss(pred, conf_th=0.9, fraction=0.66, lambda_selftrain=1.0):
    """Pure-JAX reference with exact top-k semantics (for the sanity check)."""
    B, C, H, W = pred.shape
    N = H * W
    logits = pred.reshape(B, C, N).astype(jnp.float32)
    m = jnp.max(logits, axis=1, keepdims=True)
    den = jnp.sum(jnp.exp(logits - m), axis=1, keepdims=True)
    max_prob = (1.0 / den)[:, 0, :]
    logden = jnp.log(den)[:, 0, :]
    pseudo = jnp.argmax(logits, axis=1)
    mask = max_prob > conf_th
    idx = jnp.arange(N)
    for c in range(C):
        mc = pseudo == c
        cnt = jnp.sum(mc, axis=1, keepdims=True).astype(jnp.float32)
        k = jnp.floor(cnt * jnp.float32(fraction))
        vj = jnp.where(mc, max_prob, -1.0)
        gt = vj[:, :, None] > max_prob[:, None, :]
        eq = (vj[:, :, None] == max_prob[:, None, :]) & (idx[:, None] < idx[None, :])
        rank = jnp.sum((gt | eq).astype(jnp.float32), axis=1)
        mask = mask | (mc & (rank < k))
    loss = jnp.where(mask, logden, 0.0)
    return jnp.mean(loss) * jnp.float32(lambda_selftrain)


if __name__ == "__main__":
    key = jax.random.PRNGKey(0)
    # small shapes consistent with the module: batch=2, classes=4, spatial=16x16
    pred = jax.random.normal(key, (2, 4, 16, 16), dtype=jnp.float32) * 3.0

    ref = jax.block_until_ready(_reference_loss(pred))

    # default tiling (single spatial tile) and an explicit 128-pixel tiling
    # (exercises the den/label cache and the cross-tile boundary carry path)
    for tile_n in (None, 128):
        loss = self_training_loss(pred, conf_th=0.9, fraction=0.66,
                                  ignore_index=255, lambda_selftrain=1.0,
                                  tile_n=tile_n)
        loss = jax.block_until_ready(loss)
        assert bool(jnp.isfinite(loss)), "kernel produced non-finite loss"
        assert abs(float(loss) - float(ref)) <= 1e-3 * max(1.0, abs(float(ref))), (
            f"mismatch (tile_n={tile_n}): kernel={float(loss)} ref={float(ref)}")

    print("KERNEL_OK")
</pallas_src>

<mosaic_0001>
module attributes {stable_mosaic.version = 11 : i64} {
  func.func @_self_training_kernel(%arg0: i32, %arg1: i32, %arg2: i32, %arg3: memref<1x4x256xf32, #tpu.memory_space<vmem>>, %arg4: memref<1x1x128xf32, #tpu.memory_space<vmem>>, %arg5: memref<4x512xf32, #tpu.memory_space<vmem>>, %arg6: memref<4x1xf32, #tpu.memory_space<vmem>>, %arg7: memref<4x1xf32, #tpu.memory_space<vmem>>, %arg8: memref<4x1xf32, #tpu.memory_space<vmem>>, %arg9: memref<1x256xf32, #tpu.memory_space<vmem>>, %arg10: memref<1x256xi32, #tpu.memory_space<vmem>>, %arg11: memref<1x1xf32, #tpu.memory_space<vmem>>) attributes {dimension_semantics = [#tpu.dimension_semantics<parallel>, #tpu.dimension_semantics<arbitrary>, #tpu.dimension_semantics<arbitrary>], iteration_bounds = array<i64: 2, 2, 1>, scalar_prefetch = 0 : i64, scratch_operands = 7 : i64, tpu.core_type = #tpu.core_type<tc>, window_params = [{transform_indices = @transform_0, window_bounds = array<i64: 1, 4, 256>}, {transform_indices = @transform_1, window_bounds = array<i64: 1, 1, 128>}]} {
    %0 = tpu.iota {dimensions = array<i32: 0>} : vector<4x256xi32>
    %c0_i32 = arith.constant 0 : i32
    %1 = arith.cmpi eq, %arg1, %c0_i32 : i32
    %2 = arith.extui %1 : i1 to i32
    %cst = arith.constant 170.666672 : f32
    %c0_i32_0 = arith.constant 0 : i32
    %3 = arith.cmpi ne, %2, %c0_i32_0 : i32
    scf.if %3 {
      %c0 = arith.constant 0 : index
      %c0_6 = arith.constant 0 : index
      %c0_7 = arith.constant 0 : index
      %12 = vector.load %arg3[%c0, %c0_6, %c0_7] : memref<1x4x256xf32, #tpu.memory_space<vmem>>, vector<1x4x256xf32>
      %13 = vector.shape_cast %12 : vector<1x4x256xf32> to vector<4x256xf32>
      %cst_8 = arith.constant dense<0xFF800000> : vector<256xf32>
      %14 = vector.multi_reduction <maximumf>, %13, %cst_8 [0] : vector<4x256xf32> to vector<256xf32>
      %15 = vector.shape_cast %14 : vector<256xf32> to vector<1x256xf32>
      %16 = vector.broadcast %15 : vector<1x256xf32> to vector<4x256xf32>
      %17 = arith.subf %13, %16 : vector<4x256xf32>
      %18 = math.exp %17 : vector<4x256xf32>
      %cst_9 = arith.constant dense<0.000000e+00> : vector<256xf32>
      %19 = vector.multi_reduction <add>, %18, %cst_9 [0] : vector<4x256xf32> to vector<256xf32>
      %20 = vector.shape_cast %19 : vector<256xf32> to vector<1x256xf32>
      %21 = vector.broadcast %15 : vector<1x256xf32> to vector<4x256xf32>
      %22 = arith.cmpf oeq, %13, %21 : vector<4x256xf32>
      %c4_i32 = arith.constant 4 : i32
      %23 = vector.broadcast %c4_i32 : i32 to vector<4x256xi32>
      %24 = arith.select %22, %0, %23 : vector<4x256xi1>, vector<4x256xi32>
      %cst_10 = arith.constant dense<2147483647> : vector<256xi32>
      %25 = vector.multi_reduction <minsi>, %24, %cst_10 [0] : vector<4x256xi32> to vector<256xi32>
      %26 = vector.shape_cast %25 : vector<256xi32> to vector<1x256xi32>
      %27 = arith.index_cast %arg2 : i32 to index
      %c0_11 = arith.constant 0 : index
      %28 = vector.load %arg9[%27, %c0_11] : memref<1x256xf32, #tpu.memory_space<vmem>>, vector<1x256xf32>
      tpu.vector_store %arg9[%27, %c0_11], %20 {strides = array<i32>} : memref<1x256xf32, #tpu.memory_space<vmem>>, vector<1x256xf32>,
      %29 = arith.index_cast %arg2 : i32 to index
      %c0_12 = arith.constant 0 : index
      %30 = vector.load %arg10[%29, %c0_12] : memref<1x256xi32, #tpu.memory_space<vmem>>, vector<1x256xi32>
      tpu.vector_store %arg10[%29, %c0_12], %26 {strides = array<i32>} : memref<1x256xi32, #tpu.memory_space<vmem>>, vector<1x256xi32>,
      %31 = vector.broadcast %26 : vector<1x256xi32> to vector<4x256xi32>
      %32 = arith.cmpi eq, %0, %31 : vector<4x256xi32>
      %33 = arith.extui %32 : vector<4x256xi1> to vector<4x256xi32>
      %34 = arith.sitofp %33 : vector<4x256xi32> to vector<4x256xf32>
      %cst_13 = arith.constant 1.000000e+00 : f32
      %35 = vector.broadcast %cst_13 : f32 to vector<1x256xf32>
      %36 = arith.subf %20, %35 : vector<1x256xf32>
      %37 = vector.broadcast %cst : f32 to vector<1x256xf32>
      %38 = arith.mulf %36, %37 : vector<1x256xf32>
      %cst_14 = arith.constant 0.000000e+00 : f32
      %cst_15 = arith.constant 5.110000e+02 : f32
      %39 = vector.broadcast %cst_14 : f32 to vector<1x256xf32>
      %40 = arith.maximumf %39, %38 : vector<1x256xf32>
      %41 = vector.broadcast %cst_15 : f32 to vector<1x256xf32>
      %42 = arith.minimumf %41, %40 : vector<1x256xf32>
      %43 = arith.fptosi %42 : vector<1x256xf32> to vector<1x256xi32>
      %44 = tpu.iota {dimensions = array<i32: 0>} : vector<512x256xi32>
      %45 = vector.broadcast %43 : vector<1x256xi32> to vector<512x256xi32>
      %46 = arith.cmpi sge, %44, %45 : vector<512x256xi32>
      %47 = arith.extui %46 : vector<512x256xi1> to vector<512x256xi32>
      %48 = arith.sitofp %47 : vector<512x256xi32> to vector<512x256xf32>
      %c0_i32_16 = arith.constant 0 : i32
      %49 = arith.cmpi eq, %arg2, %c0_i32_16 : i32
      %50 = arith.extui %49 : i1 to i32
      %c0_i32_17 = arith.constant 0 : i32
      %51 = arith.cmpi ne, %50, %c0_i32_17 : i32
      scf.if %51 {
        %cst_23 = arith.constant 0.000000e+00 : f32
        %56 = vector.broadcast %cst_23 : f32 to vector<4x512xf32>
        %c0_24 = arith.constant 0 : index
        %c0_25 = arith.constant 0 : index
        %57 = vector.load %arg5[%c0_24, %c0_25] : memref<4x512xf32, #tpu.memory_space<vmem>>, vector<4x512xf32>
        tpu.vector_store %arg5[%c0_24, %c0_25], %56 {strides = array<i32>} : memref<4x512xf32, #tpu.memory_space<vmem>>, vector<4x512xf32>,
      } else {
      }
      %c0_18 = arith.constant 0 : index
      %c0_19 = arith.constant 0 : index
      %52 = vector.load %arg5[%c0_18, %c0_19] : memref<4x512xf32, #tpu.memory_space<vmem>>, vector<4x512xf32>
      %cst_20 = arith.constant dense<0.000000e+00> : vector<4x512xf32>
      %53 = tpu.matmul %34, %48, %cst_20 {dimension_numbers = #tpu.dot_dimension_numbers<[1], [1], [0], [0], [0, 0, 1, 0], [], []>} : vector<4x256xf32>, vector<512x256xf32>, vector<4x512xf32> -> vector<4x512xf32>
      %54 = arith.addf %52, %53 : vector<4x512xf32>
      %c0_21 = arith.constant 0 : index
      %c0_22 = arith.constant 0 : index
      %55 = vector.load %arg5[%c0_21, %c0_22] : memref<4x512xf32, #tpu.memory_space<vmem>>, vector<4x512xf32>
      tpu.vector_store %arg5[%c0_21, %c0_22], %54 {strides = array<i32>} : memref<4x512xf32, #tpu.memory_space<vmem>>, vector<4x512xf32>,
    } else {
    }
    %c1_i32 = arith.constant 1 : i32
    %4 = arith.cmpi eq, %arg1, %c1_i32 : i32
    %c0_i32_1 = arith.constant 0 : i32
    %5 = arith.cmpi eq, %arg2, %c0_i32_1 : i32
    %6 = arith.andi %4, %5 : i1
    %7 = arith.extui %6 : i1 to i32
    %c0_i32_2 = arith.constant 0 : i32
    %8 = arith.cmpi ne, %7, %c0_i32_2 : i32
    scf.if %8 {
      %c0 = arith.constant 0 : index
      %c0_6 = arith.constant 0 : index
      %12 = vector.load %arg5[%c0, %c0_6] : memref<4x512xf32, #tpu.memory_space<vmem>>, vector<4x512xf32>
      %13 = vector.extract_strided_slice %12 {offsets = [0, 511], sizes = [4, 1], strides = [1, 1]} : vector<4x512xf32> to vector<4x1xf32>
      %cst_7 = arith.constant 6.600000e-01 : f32
      %14 = vector.broadcast %cst_7 : f32 to vector<4x1xf32>
      %15 = arith.mulf %13, %14 : vector<4x1xf32>
      %16 = math.floor %15 : vector<4x1xf32>
      %17 = tpu.iota {dimensions = array<i32: 1>} : vector<4x512xi32>
      %18 = arith.sitofp %17 : vector<4x512xi32> to vector<4x512xf32>
      %19 = vector.broadcast %16 : vector<4x1xf32> to vector<4x512xf32>
      %20 = arith.cmpf oge, %12, %19 : vector<4x512xf32>
      %cst_8 = arith.constant 5.120000e+02 : f32
      %21 = vector.broadcast %cst_8 : f32 to vector<4x512xf32>
      %22 = arith.select %20, %18, %21 : vector<4x512xi1>, vector<4x512xf32>
      %cst_9 = arith.constant dense<0x7F800000> : vector<4xf32>
      %23 = vector.multi_reduction <minimumf>, %22, %cst_9 [1] : vector<4x512xf32> to vector<4xf32>
      %24 = vector.shape_cast %23 : vector<4xf32> to vector<4x1xf32>
      %cst_10 = arith.constant 1.000000e+00 : f32
      %25 = vector.broadcast %cst_10 : f32 to vector<4x1xf32>
      %26 = arith.subf %24, %25 : vector<4x1xf32>
      %27 = vector.broadcast %26 : vector<4x1xf32> to vector<4x512xf32>
      %28 = arith.cmpf oeq, %18, %27 : vector<4x512xf32>
      %cst_11 = arith.constant 0.000000e+00 : f32
      %29 = vector.broadcast %cst_11 : f32 to vector<4x512xf32>
      %30 = arith.select %28, %12, %29 : vector<4x512xi1>, vector<4x512xf32>
      %cst_12 = arith.constant dense<0.000000e+00> : vector<4xf32>
      %31 = vector.multi_reduction <add>, %30, %cst_12 [1] : vector<4x512xf32> to vector<4xf32>
      %32 = vector.shape_cast %31 : vector<4xf32> to vector<4x1xf32>
      %c0_13 = arith.constant 0 : index
      %c0_14 = arith.constant 0 : index
      %33 = vector.load %arg6[%c0_13, %c0_14] : memref<4x1xf32, #tpu.memory_space<vmem>>, vector<4x1xf32>
      tpu.vector_store %arg6[%c0_13, %c0_14], %24 {strides = array<i32>} : memref<4x1xf32, #tpu.memory_space<vmem>>, vector<4x1xf32>,
      %34 = arith.subf %16, %32 : vector<4x1xf32>
      %c0_15 = arith.constant 0 : index
      %c0_16 = arith.constant 0 : index
      %35 = vector.load %arg7[%c0_15, %c0_16] : memref<4x1xf32, #tpu.memory_space<vmem>>, vector<4x1xf32>
      tpu.vector_store %arg7[%c0_15, %c0_16], %34 {strides = array<i32>} : memref<4x1xf32, #tpu.memory_space<vmem>>, vector<4x1xf32>,
      %cst_17 = arith.constant 0.000000e+00 : f32
      %36 = vector.broadcast %cst_17 : f32 to vector<4x1xf32>
      %c0_18 = arith.constant 0 : index
      %c0_19 = arith.constant 0 : index
      %37 = vector.load %arg8[%c0_18, %c0_19] : memref<4x1xf32, #tpu.memory_space<vmem>>, vector<4x1xf32>
      tpu.vector_store %arg8[%c0_18, %c0_19], %36 {strides = array<i32>} : memref<4x1xf32, #tpu.memory_space<vmem>>, vector<4x1xf32>,
    } else {
    }
    %c1_i32_3 = arith.constant 1 : i32
    %9 = arith.cmpi eq, %arg1, %c1_i32_3 : i32
    %10 = arith.extui %9 : i1 to i32
    %cst_4 = arith.constant 170.666672 : f32
    %c0_i32_5 = arith.constant 0 : i32
    %11 = arith.cmpi ne, %10, %c0_i32_5 : i32
    scf.if %11 {
      %12 = arith.index_cast %arg2 : i32 to index
      %c0 = arith.constant 0 : index
      %13 = vector.load %arg9[%12, %c0] : memref<1x256xf32, #tpu.memory_space<vmem>>, vector<1x256xf32>
      %14 = arith.index_cast %arg2 : i32 to index
      %c0_6 = arith.constant 0 : index
      %15 = vector.load %arg10[%14, %c0_6] : memref<1x256xi32, #tpu.memory_space<vmem>>, vector<1x256xi32>
      %16 = math.log %13 : vector<1x256xf32>
      %cst_7 = arith.constant 1.11111116 : f32
      %17 = vector.broadcast %cst_7 : f32 to vector<1x256xf32>
      %18 = arith.cmpf olt, %13, %17 : vector<1x256xf32>
      %19 = vector.broadcast %15 : vector<1x256xi32> to vector<4x256xi32>
      %20 = arith.cmpi eq, %0, %19 : vector<4x256xi32>
      %21 = arith.extui %20 : vector<4x256xi1> to vector<4x256xi32>
      %22 = arith.sitofp %21 : vector<4x256xi32> to vector<4x256xf32>
      %cst_8 = arith.constant 1.000000e+00 : f32
      %23 = vector.broadcast %cst_8 : f32 to vector<1x256xf32>
      %24 = arith.subf %13, %23 : vector<1x256xf32>
      %25 = vector.broadcast %cst_4 : f32 to vector<1x256xf32>
      %26 = arith.mulf %24, %25 : vector<1x256xf32>
      %cst_9 = arith.constant 0.000000e+00 : f32
      %cst_10 = arith.constant 5.110000e+02 : f32
      %27 = vector.broadcast %cst_9 : f32 to vector<1x256xf32>
      %28 = arith.maximumf %27, %26 : vector<1x256xf32>
      %29 = vector.broadcast %cst_10 : f32 to vector<1x256xf32>
      %30 = arith.minimumf %29, %28 : vector<1x256xf32>
      %31 = arith.fptosi %30 : vector<1x256xf32> to vector<1x256xi32>
      %32 = arith.sitofp %31 : vector<1x256xi32> to vector<1x256xf32>
      %c0_11 = arith.constant 0 : index
      %c0_12 = arith.constant 0 : index
      %33 = vector.load %arg6[%c0_11, %c0_12] : memref<4x1xf32, #tpu.memory_space<vmem>>, vector<4x1xf32>
      %34 = vector.broadcast %33 : vector<4x1xf32> to vector<4x256xf32>
      %35 = arith.mulf %22, %34 : vector<4x256xf32>
      %cst_13 = arith.constant dense<0.000000e+00> : vector<256xf32>
      %36 = vector.multi_reduction <add>, %35, %cst_13 [0] : vector<4x256xf32> to vector<256xf32>
      %37 = vector.shape_cast %36 : vector<256xf32> to vector<1x256xf32>
      %38 = arith.cmpf olt, %32, %37 : vector<1x256xf32>
      %39 = arith.ori %18, %38 : vector<1x256xi1>
      %cst_14 = arith.constant 0.000000e+00 : f32
      %40 = vector.broadcast %cst_14 : f32 to vector<1x256xf32>
      %41 = arith.select %39, %16, %40 : vector<1x256xi1>, vector<1x256xf32>
      %cst_15 = arith.constant dense<0.000000e+00> : vector<1xf32>
      %42 = vector.multi_reduction <add>, %41, %cst_15 [1] : vector<1x256xf32> to vector<1xf32>
      %43 = vector.shape_cast %42 : vector<1xf32> to vector<1x1xf32>
      %44 = arith.cmpf oeq, %32, %37 : vector<1x256xf32>
      %45 = arith.extui %44 : vector<1x256xi1> to vector<1x256xi32>
      %46 = arith.sitofp %45 : vector<1x256xi32> to vector<1x256xf32>
      %47 = vector.broadcast %46 : vector<1x256xf32> to vector<4x256xf32>
      %48 = arith.mulf %22, %47 : vector<4x256xf32>
      %49 = tpu.iota {dimensions = array<i32: 0>} : vector<128x128xi32>
      %50 = tpu.iota {dimensions = array<i32: 1>} : vector<128x128xi32>
      %51 = arith.cmpi slt, %49, %50 : vector<128x128xi32>
      %52 = arith.extui %51 : vector<128x128xi1> to vector<128x128xi32>
      %53 = arith.sitofp %52 : vector<128x128xi32> to vector<128x128xf32>
      %54 = arith.truncf %53 : vector<128x128xf32> to vector<128x128xbf16>
      %c0_16 = arith.constant 0 : index
      %c0_17 = arith.constant 0 : index
      %55 = vector.load %arg8[%c0_16, %c0_17] : memref<4x1xf32, #tpu.memory_space<vmem>>, vector<4x1xf32>
      %c0_18 = arith.constant 0 : index
      %c0_19 = arith.constant 0 : index
      %56 = vector.load %arg7[%c0_18, %c0_19] : memref<4x1xf32, #tpu.memory_space<vmem>>, vector<4x1xf32>
      %57 = vector.extract_strided_slice %48 {offsets = [0, 0], sizes = [4, 128], strides = [1, 1]} : vector<4x256xf32> to vector<4x128xf32>
      %58 = arith.truncf %57 : vector<4x128xf32> to vector<4x128xbf16>
      %cst_20 = arith.constant dense<0.000000e+00> : vector<4x128xf32>
      %59 = tpu.matmul %58, %54, %cst_20 {dimension_numbers = #tpu.dot_dimension_numbers<[1], [0], [0], [1], [0, 0, 1, 1], [], []>} : vector<4x128xbf16>, vector<128x128xbf16>, vector<4x128xf32> -> vector<4x128xf32>
      %60 = vector.broadcast %55 : vector<4x1xf32> to vector<4x128xf32>
      %61 = arith.addf %59, %60 : vector<4x128xf32>
      %62 = vector.broadcast %56 : vector<4x1xf32> to vector<4x128xf32>
      %63 = arith.cmpf olt, %61, %62 : vector<4x128xf32>
      %64 = arith.extui %63 : vector<4x128xi1> to vector<4x128xi32>
      %65 = arith.sitofp %64 : vector<4x128xi32> to vector<4x128xf32>
      %66 = arith.mulf %57, %65 : vector<4x128xf32>
      %cst_21 = arith.constant dense<0.000000e+00> : vector<128xf32>
      %67 = vector.multi_reduction <add>, %66, %cst_21 [0] : vector<4x128xf32> to vector<128xf32>
      %68 = vector.shape_cast %67 : vector<128xf32> to vector<1x128xf32>
      %cst_22 = arith.constant 0.000000e+00 : f32
      %69 = vector.broadcast %cst_22 : f32 to vector<1x128xf32>
      %70 = arith.cmpf ogt, %68, %69 : vector<1x128xf32>
      %71 = vector.extract_strided_slice %39 {offsets = [0, 0], sizes = [1, 128], strides = [1, 1]} : vector<1x256xi1> to vector<1x128xi1>
      %cst_23 = arith.constant dense<true> : vector<1x128xi1>
      %72 = arith.xori %71, %cst_23 : vector<1x128xi1>
      %73 = arith.andi %70, %72 : vector<1x128xi1>
      %74 = vector.extract_strided_slice %16 {offsets = [0, 0], sizes = [1, 128], strides = [1, 1]} : vector<1x256xf32> to vector<1x128xf32>
      %cst_24 = arith.constant 0.000000e+00 : f32
      %75 = vector.broadcast %cst_24 : f32 to vector<1x128xf32>
      %76 = arith.select %73, %74, %75 : vector<1x128xi1>, vector<1x128xf32>
      %cst_25 = arith.constant dense<0.000000e+00> : vector<1xf32>
      %77 = vector.multi_reduction <add>, %76, %cst_25 [1] : vector<1x128xf32> to vector<1xf32>
      %78 = vector.shape_cast %77 : vector<1xf32> to vector<1x1xf32>
      %79 = arith.addf %43, %78 : vector<1x1xf32>
      %cst_26 = arith.constant dense<0.000000e+00> : vector<4xf32>
      %80 = vector.multi_reduction <add>, %57, %cst_26 [1] : vector<4x128xf32> to vector<4xf32>
      %81 = vector.shape_cast %80 : vector<4xf32> to vector<4x1xf32>
      %82 = arith.addf %55, %81 : vector<4x1xf32>
      %83 = vector.extract_strided_slice %48 {offsets = [0, 128], sizes = [4, 128], strides = [1, 1]} : vector<4x256xf32> to vector<4x128xf32>
      %84 = arith.truncf %83 : vector<4x128xf32> to vector<4x128xbf16>
      %cst_27 = arith.constant dense<0.000000e+00> : vector<4x128xf32>
      %85 = tpu.matmul %84, %54, %cst_27 {dimension_numbers = #tpu.dot_dimension_numbers<[1], [0], [0], [1], [0, 0, 1, 1], [], []>} : vector<4x128xbf16>, vector<128x128xbf16>, vector<4x128xf32> -> vector<4x128xf32>
      %86 = vector.broadcast %82 : vector<4x1xf32> to vector<4x128xf32>
      %87 = arith.addf %85, %86 : vector<4x128xf32>
      %88 = vector.broadcast %56 : vector<4x1xf32> to vector<4x128xf32>
      %89 = arith.cmpf olt, %87, %88 : vector<4x128xf32>
      %90 = arith.extui %89 : vector<4x128xi1> to vector<4x128xi32>
      %91 = arith.sitofp %90 : vector<4x128xi32> to vector<4x128xf32>
      %92 = arith.mulf %83, %91 : vector<4x128xf32>
      %cst_28 = arith.constant dense<0.000000e+00> : vector<128xf32>
      %93 = vector.multi_reduction <add>, %92, %cst_28 [0] : vector<4x128xf32> to vector<128xf32>
      %94 = vector.shape_cast %93 : vector<128xf32> to vector<1x128xf32>
      %cst_29 = arith.constant 0.000000e+00 : f32
      %95 = vector.broadcast %cst_29 : f32 to vector<1x128xf32>
      %96 = arith.cmpf ogt, %94, %95 : vector<1x128xf32>
      %97 = vector.extract_strided_slice %39 {offsets = [0, 128], sizes = [1, 128], strides = [1, 1]} : vector<1x256xi1> to vector<1x128xi1>
      %cst_30 = arith.constant dense<true> : vector<1x128xi1>
      %98 = arith.xori %97, %cst_30 : vector<1x128xi1>
      %99 = arith.andi %96, %98 : vector<1x128xi1>
      %100 = vector.extract_strided_slice %16 {offsets = [0, 128], sizes = [1, 128], strides = [1, 1]} : vector<1x256xf32> to vector<1x128xf32>
      %cst_31 = arith.constant 0.000000e+00 : f32
      %101 = vector.broadcast %cst_31 : f32 to vector<1x128xf32>
      %102 = arith.select %99, %100, %101 : vector<1x128xi1>, vector<1x128xf32>
      %cst_32 = arith.constant dense<0.000000e+00> : vector<1xf32>
      %103 = vector.multi_reduction <add>, %102, %cst_32 [1] : vector<1x128xf32> to vector<1xf32>
      %104 = vector.shape_cast %103 : vector<1xf32> to vector<1x1xf32>
      %105 = arith.addf %79, %104 : vector<1x1xf32>
      %cst_33 = arith.constant dense<0.000000e+00> : vector<4xf32>
      %106 = vector.multi_reduction <add>, %83, %cst_33 [1] : vector<4x128xf32> to vector<4xf32>
      %107 = vector.shape_cast %106 : vector<4xf32> to vector<4x1xf32>
      %108 = arith.addf %82, %107 : vector<4x1xf32>
      %c0_34 = arith.constant 0 : index
      %c0_35 = arith.constant 0 : index
      %109 = vector.load %arg8[%c0_34, %c0_35] : memref<4x1xf32, #tpu.memory_space<vmem>>, vector<4x1xf32>
      tpu.vector_store %arg8[%c0_34, %c0_35], %108 {strides = array<i32>} : memref<4x1xf32, #tpu.memory_space<vmem>>, vector<4x1xf32>,
      %c0_i32_36 = arith.constant 0 : i32
      %110 = arith.cmpi eq, %arg2, %c0_i32_36 : i32
      %111 = arith.extui %110 : i1 to i32
      %c0_i32_37 = arith.constant 0 : i32
      %112 = arith.cmpi ne, %111, %c0_i32_37 : i32
      scf.if %112 {
        %cst_44 = arith.constant 0.000000e+00 : f32
        %119 = vector.broadcast %cst_44 : f32 to vector<1x1xf32>
        %c0_45 = arith.constant 0 : index
        %c0_46 = arith.constant 0 : index
        %120 = vector.load %arg11[%c0_45, %c0_46] : memref<1x1xf32, #tpu.memory_space<vmem>>, vector<1x1xf32>
        tpu.vector_store %arg11[%c0_45, %c0_46], %119 {strides = array<i32>} : memref<1x1xf32, #tpu.memory_space<vmem>>, vector<1x1xf32>,
      } else {
      }
      %c0_38 = arith.constant 0 : index
      %c0_39 = arith.constant 0 : index
      %113 = vector.load %arg11[%c0_38, %c0_39] : memref<1x1xf32, #tpu.memory_space<vmem>>, vector<1x1xf32>
      %114 = arith.addf %113, %105 : vector<1x1xf32>
      %c0_40 = arith.constant 0 : index
      %c0_41 = arith.constant 0 : index
      %115 = vector.load %arg11[%c0_40, %c0_41] : memref<1x1xf32, #tpu.memory_space<vmem>>, vector<1x1xf32>
      tpu.vector_store %arg11[%c0_40, %c0_41], %114 {strides = array<i32>} : memref<1x1xf32, #tpu.memory_space<vmem>>, vector<1x1xf32>,
      %c0_i32_42 = arith.constant 0 : i32
      %116 = arith.cmpi eq, %arg2, %c0_i32_42 : i32
      %117 = arith.extui %116 : i1 to i32
      %c0_i32_43 = arith.constant 0 : i32
      %118 = arith.cmpi ne, %117, %c0_i32_43 : i32
      scf.if %118 {
        %c0_44 = arith.constant 0 : index
        %c0_45 = arith.constant 0 : index
        %119 = vector.load %arg11[%c0_44, %c0_45] : memref<1x1xf32, #tpu.memory_space<vmem>>, vector<1x1xf32>
        %120 = vector.shape_cast %119 : vector<1x1xf32> to vector<1x1x1xf32>
        %121 = vector.broadcast %120 : vector<1x1x1xf32> to vector<1x1x128xf32>
        %c0_46 = arith.constant 0 : index
        %c0_47 = arith.constant 0 : index
        %c0_48 = arith.constant 0 : index
        %122 = vector.load %arg4[%c0_46, %c0_47, %c0_48] : memref<1x1x128xf32, #tpu.memory_space<vmem>>, vector<1x1x128xf32>
        tpu.vector_store %arg4[%c0_46, %c0_47, %c0_48], %121 {strides = array<i32>} : memref<1x1x128xf32, #tpu.memory_space<vmem>>, vector<1x1x128xf32>,
      } else {
      }
    } else {
    }
    return
  }
  func.func @transform_0(%arg0: i32, %arg1: i32, %arg2: i32) -> (i32, i32, i32) {
    %c1_i32 = arith.constant 1 : i32
    %0 = arith.subi %c1_i32, %arg1 : i32
    %1 = arith.muli %arg2, %0 : i32
    %c0_i32 = arith.constant 0 : i32
    %2 = arith.muli %arg1, %c0_i32 : i32
    %3 = arith.addi %1, %2 : i32
    %c0_i32_0 = arith.constant 0 : i32
    %c0_i32_1 = arith.constant 0 : i32
    return %arg0, %c0_i32_0, %3 : i32, i32, i32
  }
  func.func @transform_1(%arg0: i32, %arg1: i32, %arg2: i32) -> (i32, i32, i32) {
    %c0_i32 = arith.constant 0 : i32
    %c0_i32_0 = arith.constant 0 : i32
    %c0_i32_1 = arith.constant 0 : i32
    return %arg0, %c0_i32, %c0_i32_0 : i32, i32, i32
  }
}

</mosaic_0001>

<llo_original>
// kernel: tpu_custom_call.1
$region0: #{tpu_custom_call.1}
  #allocation0 [shape = 'u32[]', space=smem, size = 0x4, offset = 0x4, fixed_abs, tag = 'smem constant byte address 0x4 - core index']
  #allocation1 [shape = 'u32[72,128]{1,0:T(1,128)}', space=vmem, size = 0x9000, scoped, tag = 'internal scratch']
  #allocation2 [shape = 'f32[4,512]{1,0:T(4,128)}', space=vmem, size = 0x2000, scoped, tag = 'scratch operand']
  #allocation3 [shape = 'f32[4,1]{1,0:T(4,128)}', space=vmem, size = 0x800, scoped, tag = 'scratch operand']
  #allocation4 [shape = 'f32[4,1]{1,0:T(4,128)}', space=vmem, size = 0x800, scoped, tag = 'scratch operand']
  #allocation5 [shape = 'f32[4,1]{1,0:T(4,128)}', space=vmem, size = 0x800, scoped, tag = 'scratch operand']
  #allocation6 [shape = 'f32[1,256]{1,0:T(1,128)}', space=vmem, size = 0x400, scoped, tag = 'scratch operand']
  #allocation7 [shape = 's32[1,256]{1,0:T(1,128)}', space=vmem, size = 0x400, scoped, tag = 'scratch operand']
  #allocation8 [shape = 'f32[1,1]{1,0:T(1,128)}', space=vmem, size = 0x200, scoped, tag = 'scratch operand']
  %s0 = inlined_call_operand.hbm [shape: f32[2,4,256], index: 0, kind: input, shape index: {}]
  %s1 = inlined_call_operand.hbm [shape: f32[2,1,128], index: 1, kind: output, shape index: {}]
  %s2 = sld [smem:[#allocation0]]
  $region65: #{tpu_custom_call.1} parent=0
    _
  %s4 = ssub.s32 1, %s2
  %s5 = scalar_select 0, %s4, %s2
  $region1: #{tpu_custom_call.1} parent=0
    #allocation9 [shape = 'u8[8192]{0}', space=vmem, size = 0x2000, scoped, tag = 'input window, operand 0']
    #allocation10 [shape = 's32[2]{0}', space=sflag, size = 0x8, scoped, tag = 'scoped memory for tpu_custom_call.1']
    #allocation11 [shape = 's32[2]{0}', space=sflag, size = 0x8, scoped, tag = 'scoped memory for tpu_custom_call.1']
    #allocation12 [shape = 'u8[1024]{0}', space=vmem, size = 0x400, scoped, tag = 'output window, operand 0']
    %6 = vsyncpa [#allocation10], 0
    %s7 = scalar_lea.sflag [#allocation10], 1
    %8 = vsyncpa %s7, 0
    %9 = vsyncpa [#allocation11], 0
    %s10 = scalar_lea.sflag [#allocation11], 1
    %11 = vsyncpa %s10, 0
    loop: start=0, step=1, limit=6
    $region2: #{tpu_custom_call.1} parent=1 // loop_pre_header
      _
    $region3: #{tpu_custom_call.1} parent=1 // loop_header
      %s13 = sphi 0, %s17
      %p14 = scmp.ge.s32.totalorder %s13, 6
      %s20 = sphi 0, %s39
      %s21 = sphi 0, %s35
      %s22 = sphi 0, %s31
      %s23 = sphi 0, %s20
      %s24 = sphi 0, %s21
      %s25 = sphi 0, %s22
      %s26 = sphi 0, %s23
      %s27 = sphi 0, %s24
      %s28 = sphi 0, %s25
      %s48 = sphi 0, %s50
      %s51 = sphi 0, %s48
      %s52 = sphi 0, %s51
      %s68 = sphi 0, %s52
      %s74 = sphi 0, %s76
      %s77 = sphi 0, %s74
      %s78 = sphi 0, %s77
      %s94 = sphi 0, %s78
    $region4: #{tpu_custom_call.1} parent=1 // loop_header_branch
      %16 = sbr.rel (%p14) target = $region8
    $region5: #{tpu_custom_call.1} parent=1 // loop_body
      %s18 = ssub.s32 %s13, 1
      %s19 = ssub.s32 %s13, 2
      %s29 = sadd.s32 1, %s22
      %p30 = scmp.ge.s32.totalorder %s29, 1
      %s31 = scalar_select %p30, 0, %s29
      %s32 = sadd.s32 1, %s21
      %s33 = scalar_select %p30, %s32, %s21
      %p34 = scmp.ge.s32.totalorder %s33, 2
      %s35 = scalar_select %p34, 0, %s33
      %s36 = sadd.s32 1, %s20
      %s37 = scalar_select %p34, %s36, %s20
      %p38 = scmp.ge.s32.totalorder %s37, 2
      %s39 = scalar_select %p38, 0, %s37
      %s40 = ssub.s32 1, %s21
      %s41 = smul.u32 %s22, %s40
      %s42 = ssub.s32 1, %s35
      %s43 = smul.u32 %s31, %s42
      %s44 = ssub.s32 %s20, %s39
      %s45 = ssub.s32 %s41, %s43
      %s46 = sor.u32 %s44, %s45
      %p47 = scmp.eq.s32.totalorder %s46, 0
      %s49 = sadd.s32 %s48, 1
      %s50 = scalar_select %p47, %s48, %s49
      %p53 = pneg %p47
      %p54 = scmp.eq.s32.totalorder %s13, 3
      %p55 = por %p53, %p54
      %p56 = scmp.ne.s32.totalorder %s48, %s51
      %p57 = scmp.eq.s32.totalorder %s13, 0
      %p58 = por %p56, %p57
      %p59 = scmp.ne.s32.totalorder %s48, %s51
      %p60 = scmp.eq.s32.totalorder %s18, 3
      %p61 = por %p59, %p60
      %p62 = scmp.ne.s32.totalorder %s51, %s52
      %p63 = scmp.eq.s32.totalorder %s18, 0
      %p64 = por %p62, %p63
      %p65 = scmp.ne.s32.totalorder %s51, %s52
      %p66 = scmp.eq.s32.totalorder %s19, 3
      %p67 = por %p65, %p66
      %p69 = scmp.ne.s32.totalorder %s52, %s68
      %p70 = scmp.eq.s32.totalorder %s19, 0
      %p71 = por %p69, %p70
      %s72 = ssub.s32 %s20, %s39
      %p73 = scmp.eq.s32.totalorder %s72, 0
      %s75 = sadd.s32 %s74, 1
      %s76 = scalar_select %p73, %s74, %s75
      %p79 = pneg %p73
      %p80 = scmp.eq.s32.totalorder %s13, 3
      %p81 = por %p79, %p80
      %p82 = scmp.ne.s32.totalorder %s74, %s77
      %p83 = scmp.eq.s32.totalorder %s13, 0
      %p84 = por %p82, %p83
      %p85 = scmp.ne.s32.totalorder %s74, %s77
      %p86 = scmp.eq.s32.totalorder %s18, 3
      %p87 = por %p85, %p86
      %p88 = scmp.ne.s32.totalorder %s77, %s78
      %p89 = scmp.eq.s32.totalorder %s18, 0
      %p90 = por %p88, %p89
      %p91 = scmp.ne.s32.totalorder %s77, %s78
      %p92 = scmp.eq.s32.totalorder %s19, 3
      %p93 = por %p91, %p92
      %p95 = scmp.ne.s32.totalorder %s78, %s94
      %p96 = scmp.eq.s32.totalorder %s19, 0
      %p97 = por %p95, %p96
      %p98 = scmp.le.s32.totalorder 1, %s13
      %p99 = scmp.lt.s32.totalorder %s13, 5
      %p100 = pnand %p98, %p99
      %p101 = pneg %p100
      // Predicated region
      $region9: #{tpu_custom_call.1} parent=5 // pred_check
        _
      $region10: #{tpu_custom_call.1} parent=5 // pred_check_branch
        %103 = sbr.rel (%p100) target = $region12
      $region11: #{tpu_custom_call.1} parent=5 // pred_region
        %s104 = ssub.s32 %s13, 1
      $region12: #{tpu_custom_call.1} parent=5 // pred_fallthru
        _
      %p105 = scmp.lt.s32.totalorder %s13, 4
      // Predicated region
      $region13: #{tpu_custom_call.1} parent=5 // pred_check
        %p106 = pneg %p105
      $region14: #{tpu_custom_call.1} parent=5 // pred_check_branch
        %108 = sbr.rel (%p106) target = $region16
      $region15: #{tpu_custom_call.1} parent=5 // pred_region
        // Predicated region
        $region17: #{tpu_custom_call.1} parent=15 // pred_check
          %p109 = pneg %p58
        $region18: #{tpu_custom_call.1} parent=15 // pred_check_branch
          %111 = sbr.rel (%p109) target = $region20
        $region19: #{tpu_custom_call.1} parent=15 // pred_region
          %s112 = sand.u32 %s48, 1
          %s113 = scalar_lea.sflag [#allocation10], %s112
          %s114 = sand.u32 %s48, 1
          %s115 = smul.addr %s114, 8
          %s116 = scalar_lea.vmem [#allocation9], %s115
          %s117 = ssub.s32 1, %s21
          %s118 = smul.u32 %s22, %s117
          %s119 = smul.u32 2, %s118
          %121 = vsyncadd %s113, 0
          %s122 = smul.addr %s20, 2
          %s123 = sadd.s32 %s119, %s122
          %s124 = smul.addr %s123, 4
          %s125 = scalar_lea.hbm %s0, %s124
          %s127 = sshll.u32 %s125, 4
          %s128 = int_to_ptr.hbm [resolvable:$true] %s127
          %s129 = sshll.u32 %s116, 4
          %s130 = int_to_ptr.vmem [resolvable:$true] %s129
          %132 = dma.hbm_to_vmem [thread:$0]  %s128, 128, %s130, %s113
        $region20: #{tpu_custom_call.1} parent=15 // pred_fallthru
          _
      $region16: #{tpu_custom_call.1} parent=5 // pred_fallthru
        _
      %p133 = scmp.le.s32.totalorder 1, %s13
      %p134 = scmp.lt.s32.totalorder %s13, 5
      %p135 = pnand %p133, %p134
      %p136 = pneg %p135
      // Predicated region
      $region21: #{tpu_custom_call.1} parent=5 // pred_check
        _
      $region22: #{tpu_custom_call.1} parent=5 // pred_check_branch
        %138 = sbr.rel (%p135) target = $region24
      $region23: #{tpu_custom_call.1} parent=5 // pred_region
        %s139 = ssub.s32 %s13, 1
        %s140 = sand.u32 %s51, 1
        %s141 = scalar_lea.sflag [#allocation10], %s140
        %s142 = sand.u32 %s51, 1
        %s143 = smul.addr %s142, 8
        %s144 = scalar_lea.vmem [#allocation9], %s143
        // Predicated region
        $region25: #{tpu_custom_call.1} parent=23 // pred_check
          %p145 = pneg %p64
        $region26: #{tpu_custom_call.1} parent=23 // pred_check_branch
          %147 = sbr.rel (%p145) target = $region28
        $region27: #{tpu_custom_call.1} parent=23 // pred_region
          %149 = dma.done %s141, 128
        $region28: #{tpu_custom_call.1} parent=23 // pred_fallthru
          _
        %s150 = sand.u32 %s51, 1
        %s151 = scalar_lea.sflag [#allocation10], %s150
        %s152 = sand.u32 %s51, 1
        %s153 = smul.addr %s152, 8
        %s154 = scalar_lea.vmem [#allocation9], %s153
        %p155 = pneg %p64
        %p156 = pneg %p61
        %p157 = pneg %p90
        %p158 = pneg %p87
        %s159 = sand.u32 %s77, 1
        %s160 = scalar_lea.sflag [#allocation11], %s159
        %s161 = sand.u32 %s77, 1
        %s162 = scalar_lea.vmem [#allocation12], %s161
        %s163 = ssub.s32 1, %s24
        %s164 = smul.u32 %s25, %s163
        %s165 = smul.u32 2, %s164
        %v166 = vlaneseq
        %v167 = vshrl.u32 %v166, 7
        %p168 = scmp.eq.s32.totalorder %s24, 0
        // Predicated region
        $region29: #{tpu_custom_call.1} parent=23 // pred_check
          %p169 = pneg %p168
        $region30: #{tpu_custom_call.1} parent=23 // pred_check_branch
          %171 = sbr.rel (%p169) target = $region32
        $region31: #{tpu_custom_call.1} parent=23 // pred_region
          %v172 = vld [vmem:[%s144] sm:$0xff]
          %174 = vst [vmem:[#allocation1] ss:$2 sm:$0xff] %v172
          %v175 = vld.sshfl [vmem:[#allocation1] sm:$0xff pattern:$0x75316420]
          %v176 = vld.sshfl [vmem:[#allocation1 + $0x8] sm:$0xff pattern:$0x75316420]
          %vm179 = vcmask 1043456
          %v180 = vsel %vm179, %v175, -inf
          %v181 = vrot.slane %v180, 4
          %v182 = vmax.f32 %v180, %v181
          %v183 = vrot.slane %v182, 2
          %v184 = vmax.f32 %v182, %v183
          %v185 = vrot.slane %v184, 1
          %v186 = vmax.f32 %v184, %v185
          %v187 = vsel %vm179, %v176, -inf
          %v188 = vrot.slane %v187, 4
          %v189 = vmax.f32 %v187, %v188
          %v190 = vrot.slane %v189, 2
          %v191 = vmax.f32 %v189, %v190
          %v192 = vrot.slane %v191, 1
          %v193 = vmax.f32 %v191, %v192
          %v196 = vrot.slane %v193, 4
          %v197 = vsel %vm179, %v186, %v196
          %v199 = vsub.f32 %v172, %v197
          %v200 = vmul.f32 %v199, 1.442695
          %v201 = vpow.pop %v200
          %203 = vst [vmem:[#allocation1] ss:$2 sm:$0xff] %v201
          %v204 = vld.sshfl [vmem:[#allocation1] sm:$0xff pattern:$0x75316420]
          %v205 = vld.sshfl [vmem:[#allocation1 + $0x8] sm:$0xff pattern:$0x75316420]
          %v208 = vsel %vm179, %v204, 0.0
          %v209 = vrot.slane %v208, 4
          %v210 = vadd.f32 %v208, %v209
          %v211 = vrot.slane %v210, 2
          %v212 = vadd.f32 %v210, %v211
          %v213 = vrot.slane %v212, 1
          %v214 = vadd.f32 %v212, %v213
          %v215 = vsel %vm179, %v205, 0.0
          %v216 = vrot.slane %v215, 4
          %v217 = vadd.f32 %v215, %v216
          %v218 = vrot.slane %v217, 2
          %v219 = vadd.f32 %v217, %v218
          %v220 = vrot.slane %v219, 1
          %v221 = vadd.f32 %v219, %v220
          %vm222 = vcmp.eq.f32.partialorder %v172, %v197
          %v224 = vunpack.c.l.s4 839922192
          %v225 = vunpack.c.0.s8 %v224
          %v226 = vperm.slane %v167, %v225
          %v227 = vsel %vm222, %v226, 4
          %228 = vst [vmem:[#allocation1] ss:$2 sm:$0xff] %v227
          %v229 = vld.sshfl [vmem:[#allocation1] sm:$0xff pattern:$0x75316420]
          %v230 = vld.sshfl [vmem:[#allocation1 + $0x8] sm:$0xff pattern:$0x75316420]
          %v231 = vsel %vm179, %v229, 2147483647
          %v232 = vrot.slane %v231, 4
          %vm233 = vcmp.lt.s32.totalorder %v231, %v232
          %v234 = vsel %vm233, %v231, %v232
          %v235 = vrot.slane %v234, 2
          %vm236 = vcmp.lt.s32.totalorder %v234, %v235
          %v237 = vsel %vm236, %v234, %v235
          %v238 = vrot.slane %v237, 1
          %vm239 = vcmp.lt.s32.totalorder %v237, %v238
          %v240 = vsel %vm239, %v237, %v238
          %v241 = vsel %vm179, %v230, 2147483647
          %v242 = vrot.slane %v241, 4
          %vm243 = vcmp.lt.s32.totalorder %v241, %v242
          %v244 = vsel %vm243, %v241, %v242
          %v245 = vrot.slane %v244, 2
          %vm246 = vcmp.lt.s32.totalorder %v244, %v245
          %v247 = vsel %vm246, %v244, %v245
          %v248 = vrot.slane %v247, 1
          %vm249 = vcmp.lt.s32.totalorder %v247, %v248
          %v250 = vsel %vm249, %v247, %v248
          %v253 = vrot.slane %v221, 7
          %vm254 = vcmask 1040384
          %v255 = vsel %vm254, %v214, %v253
          %s257 = smul.u32 %s25, 2
          %s258 = scalar_lea.vmem [#allocation6], %s257
          %v259 = vlaneseq
          %vm260 = vcmp.ge.s32.totalorder %v259, 0
          %vm261 = vcmp.lt.s32.totalorder %v259, 256
          %vm262 = vmand %vm260, %vm261
          %263 = vst.msk [vmem:[%s258] sm:$0x3] %vm262, %v255
          %v264 = vrot.slane %v250, 7
          %v265 = vsel %vm254, %v240, %v264
          %s266 = scalar_lea.vmem [#allocation7], %s257
          %267 = vst.msk [vmem:[%s266] sm:$0x3] %vm262, %v265
          %vm268 = vcmp.eq.s32.totalorder %v167, %v240
          %vm269 = vcmp.eq.s32.totalorder %v167, %v250
          %v270 = vsel %vm268, 1, 0
          %v271 = vsel %vm269, 1, 0
          %v272 = vcvt.s32.f32 %v270
          %v273 = vcvt.s32.f32 %v271
          %v274 = vsub.f32 %v214, 1.0
          %v275 = vsub.f32 %v221, 1.0
          %v276 = vmul.f32 %v274, 170.66667
          %v277 = vmul.f32 %v275, 170.66667
          %v278 = vmax.f32 %v276, 0.0
          %v279 = vmax.f32 %v277, 0.0
          %v280 = vmin.f32 %v278, 511.0
          %v281 = vmin.f32 %v279, 511.0
          %v282 = vcvt.f32.s32.to.zero.pseudo %v280
          %v283 = vcvt.f32.s32.to.zero.pseudo %v281
          %v284 = vadd.s32 %v167, 8
          %v285 = vadd.s32 %v167, 16
          %v286 = vadd.s32 %v167, 24
          %v287 = vadd.s32 %v167, 32
          %v288 = vadd.s32 %v167, 40
          %v289 = vadd.s32 %v167, 48
          %v290 = vadd.s32 %v167, 56
          %v291 = vadd.s32 %v167, 64
          %v292 = vadd.s32 %v167, 72
          %v293 = vadd.s32 %v167, 80
          %v294 = vadd.s32 %v167, 88
          %v295 = vadd.s32 %v167, 96
          %v296 = vadd.s32 %v167, 104
          %v297 = vadd.s32 %v167, 112
          %v298 = vadd.s32 %v167, 120
          %v299 = vadd.s32 %v167, 128
          %v300 = vadd.s32 %v167, 136
          %v301 = vadd.s32 %v167, 144
          %v302 = vadd.s32 %v167, 152
          %v303 = vadd.s32 %v167, 160
          %v304 = vadd.s32 %v167, 168
          %v305 = vadd.s32 %v167, 176
          %v306 = vadd.s32 %v167, 184
          %v307 = vadd.s32 %v167, 192
          %v308 = vadd.s32 %v167, 200
          %v309 = vadd.s32 %v167, 208
          %v310 = vadd.s32 %v167, 216
          %v311 = vadd.s32 %v167, 224
          %v312 = vadd.s32 %v167, 232
          %v313 = vadd.s32 %v167, 240
          %v314 = vadd.s32 %v167, 248
          %v315 = vadd.s32 %v167, 256
          %v316 = vadd.s32 %v167, 264
          %v317 = vadd.s32 %v167, 272
          %v318 = vadd.s32 %v167, 280
          %v319 = vadd.s32 %v167, 288
          %v320 = vadd.s32 %v167, 296
          %v321 = vadd.s32 %v167, 304
          %v322 = vadd.s32 %v167, 312
          %v323 = vadd.s32 %v167, 320
          %v324 = vadd.s32 %v167, 328
          %v325 = vadd.s32 %v167, 336
          %v326 = vadd.s32 %v167, 344
          %v327 = vadd.s32 %v167, 352
          %v328 = vadd.s32 %v167, 360
          %v329 = vadd.s32 %v167, 368
          %v330 = vadd.s32 %v167, 376
          %v331 = vadd.s32 %v167, 384
          %v332 = vadd.s32 %v167, 392
          %v333 = vadd.s32 %v167, 400
          %v334 = vadd.s32 %v167, 408
          %v335 = vadd.s32 %v167, 416
          %v336 = vadd.s32 %v167, 424
          %v337 = vadd.s32 %v167, 432
          %v338 = vadd.s32 %v167, 440
          %v339 = vadd.s32 %v167, 448
          %v340 = vadd.s32 %v167, 456
          %v341 = vadd.s32 %v167, 464
          %v342 = vadd.s32 %v167, 472
          %v343 = vadd.s32 %v167, 480
          %v344 = vadd.s32 %v167, 488
          %v345 = vadd.s32 %v167, 496
          %v346 = vadd.s32 %v167, 504
          %vm347 = vcmp.ge.s32.totalorder %v167, %v282
          %vm348 = vcmp.ge.s32.totalorder %v167, %v283
          %vm349 = vcmp.ge.s32.totalorder %v284, %v282
          %vm350 = vcmp.ge.s32.totalorder %v284, %v283
          %vm351 = vcmp.ge.s32.totalorder %v285, %v282
          %vm352 = vcmp.ge.s32.totalorder %v285, %v283
          %vm353 = vcmp.ge.s32.totalorder %v286, %v282
          %vm354 = vcmp.ge.s32.totalorder %v286, %v283
          %vm355 = vcmp.ge.s32.totalorder %v287, %v282
          %vm356 = vcmp.ge.s32.totalorder %v287, %v283
          %vm357 = vcmp.ge.s32.totalorder %v288, %v282
          %vm358 = vcmp.ge.s32.totalorder %v288, %v283
          %vm359 = vcmp.ge.s32.totalorder %v289, %v282
          %vm360 = vcmp.ge.s32.totalorder %v289, %v283
          %vm361 = vcmp.ge.s32.totalorder %v290, %v282
          %vm362 = vcmp.ge.s32.totalorder %v290, %v283
          %vm363 = vcmp.ge.s32.totalorder %v291, %v282
          %vm364 = vcmp.ge.s32.totalorder %v291, %v283
          %vm365 = vcmp.ge.s32.totalorder %v292, %v282
          %vm366 = vcmp.ge.s32.totalorder %v292, %v283
          %vm367 = vcmp.ge.s32.totalorder %v293, %v282
          %vm368 = vcmp.ge.s32.totalorder %v293, %v283
          %vm369 = vcmp.ge.s32.totalorder %v294, %v282
          %vm370 = vcmp.ge.s32.totalorder %v294, %v283
          %vm371 = vcmp.ge.s32.totalorder %v295, %v282
          %vm372 = vcmp.ge.s32.totalorder %v295, %v283
          %vm373 = vcmp.ge.s32.totalorder %v296, %v282
          %vm374 = vcmp.ge.s32.totalorder %v296, %v283
          %vm375 = vcmp.ge.s32.totalorder %v297, %v282
          %vm376 = vcmp.ge.s32.totalorder %v297, %v283
          %vm377 = vcmp.ge.s32.totalorder %v298, %v282
          %vm378 = vcmp.ge.s32.totalorder %v298, %v283
          %vm379 = vcmp.ge.s32.totalorder %v299, %v282
          %vm380 = vcmp.ge.s32.totalorder %v299, %v283
          %vm381 = vcmp.ge.s32.totalorder %v300, %v282
          %vm382 = vcmp.ge.s32.totalorder %v300, %v283
          %vm383 = vcmp.ge.s32.totalorder %v301, %v282
          %vm384 = vcmp.ge.s32.totalorder %v301, %v283
          %vm385 = vcmp.ge.s32.totalorder %v302, %v282
          %vm386 = vcmp.ge.s32.totalorder %v302, %v283
          %vm387 = vcmp.ge.s32.totalorder %v303, %v282
          %vm388 = vcmp.ge.s32.totalorder %v303, %v283
          %vm389 = vcmp.ge.s32.totalorder %v304, %v282
          %vm390 = vcmp.ge.s32.totalorder %v304, %v283
          %vm391 = vcmp.ge.s32.totalorder %v305, %v282
          %vm392 = vcmp.ge.s32.totalorder %v305, %v283
          %vm393 = vcmp.ge.s32.totalorder %v306, %v282
          %vm394 = vcmp.ge.s32.totalorder %v306, %v283
          %vm395 = vcmp.ge.s32.totalorder %v307, %v282
          %vm396 = vcmp.ge.s32.totalorder %v307, %v283
          %vm397 = vcmp.ge.s32.totalorder %v308, %v282
          %vm398 = vcmp.ge.s32.totalorder %v308, %v283
          %vm399 = vcmp.ge.s32.totalorder %v309, %v282
          %vm400 = vcmp.ge.s32.totalorder %v309, %v283
          %vm401 = vcmp.ge.s32.totalorder %v310, %v282
          %vm402 = vcmp.ge.s32.totalorder %v310, %v283
          %vm403 = vcmp.ge.s32.totalorder %v311, %v282
          %vm404 = vcmp.ge.s32.totalorder %v311, %v283
          %vm405 = vcmp.ge.s32.totalorder %v312, %v282
          %vm406 = vcmp.ge.s32.totalorder %v312, %v283
          %vm407 = vcmp.ge.s32.totalorder %v313, %v282
          %vm408 = vcmp.ge.s32.totalorder %v313, %v283
          %vm409 = vcmp.ge.s32.totalorder %v314, %v282
          %vm410 = vcmp.ge.s32.totalorder %v314, %v283
          %vm411 = vcmp.ge.s32.totalorder %v315, %v282
          %vm412 = vcmp.ge.s32.totalorder %v315, %v283
          %vm413 = vcmp.ge.s32.totalorder %v316, %v282
          %vm414 = vcmp.ge.s32.totalorder %v316, %v283
          %vm415 = vcmp.ge.s32.totalorder %v317, %v282
          %vm416 = vcmp.ge.s32.totalorder %v317, %v283
          %vm417 = vcmp.ge.s32.totalorder %v318, %v282
          %vm418 = vcmp.ge.s32.totalorder %v318, %v283
          %vm419 = vcmp.ge.s32.totalorder %v319, %v282
          %vm420 = vcmp.ge.s32.totalorder %v319, %v283
          %vm421 = vcmp.ge.s32.totalorder %v320, %v282
          %vm422 = vcmp.ge.s32.totalorder %v320, %v283
          %vm423 = vcmp.ge.s32.totalorder %v321, %v282
          %vm424 = vcmp.ge.s32.totalorder %v321, %v283
          %vm425 = vcmp.ge.s32.totalorder %v322, %v282
          %vm426 = vcmp.ge.s32.totalorder %v322, %v283
          %vm427 = vcmp.ge.s32.totalorder %v323, %v282
          %vm428 = vcmp.ge.s32.totalorder %v323, %v283
          %vm429 = vcmp.ge.s32.totalorder %v324, %v282
          %vm430 = vcmp.ge.s32.totalorder %v324, %v283
          %vm431 = vcmp.ge.s32.totalorder %v325, %v282
          %vm432 = vcmp.ge.s32.totalorder %v325, %v283
          %vm433 = vcmp.ge.s32.totalorder %v326, %v282
          %vm434 = vcmp.ge.s32.totalorder %v326, %v283
          %vm435 = vcmp.ge.s32.totalorder %v327, %v282
          %vm436 = vcmp.ge.s32.totalorder %v327, %v283
          %vm437 = vcmp.ge.s32.totalorder %v328, %v282
          %vm438 = vcmp.ge.s32.totalorder %v328, %v283
          %vm439 = vcmp.ge.s32.totalorder %v329, %v282
          %vm440 = vcmp.ge.s32.totalorder %v329, %v283
          %vm441 = vcmp.ge.s32.totalorder %v330, %v282
          %vm442 = vcmp.ge.s32.totalorder %v330, %v283
          %vm443 = vcmp.ge.s32.totalorder %v331, %v282
          %vm444 = vcmp.ge.s32.totalorder %v331, %v283
          %vm445 = vcmp.ge.s32.totalorder %v332, %v282
          %vm446 = vcmp.ge.s32.totalorder %v332, %v283
          %vm447 = vcmp.ge.s32.totalorder %v333, %v282
          %vm448 = vcmp.ge.s32.totalorder %v333, %v283
          %vm449 = vcmp.ge.s32.totalorder %v334, %v282
          %vm450 = vcmp.ge.s32.totalorder %v334, %v283
          %vm451 = vcmp.ge.s32.totalorder %v335, %v282
          %vm452 = vcmp.ge.s32.totalorder %v335, %v283
          %vm453 = vcmp.ge.s32.totalorder %v336, %v282
          %vm454 = vcmp.ge.s32.totalorder %v336, %v283
          %vm455 = vcmp.ge.s32.totalorder %v337, %v282
          %vm456 = vcmp.ge.s32.totalorder %v337, %v283
          %vm457 = vcmp.ge.s32.totalorder %v338, %v282
          %vm458 = vcmp.ge.s32.totalorder %v338, %v283
          %vm459 = vcmp.ge.s32.totalorder %v339, %v282
          %vm460 = vcmp.ge.s32.totalorder %v339, %v283
          %vm461 = vcmp.ge.s32.totalorder %v340, %v282
          %vm462 = vcmp.ge.s32.totalorder %v340, %v283
          %vm463 = vcmp.ge.s32.totalorder %v341, %v282
          %vm464 = vcmp.ge.s32.totalorder %v341, %v283
          %vm465 = vcmp.ge.s32.totalorder %v342, %v282
          %vm466 = vcmp.ge.s32.totalorder %v342, %v283
          %vm467 = vcmp.ge.s32.totalorder %v343, %v282
          %vm468 = vcmp.ge.s32.totalorder %v343, %v283
          %vm469 = vcmp.ge.s32.totalorder %v344, %v282
          %vm470 = vcmp.ge.s32.totalorder %v344, %v283
          %vm471 = vcmp.ge.s32.totalorder %v345, %v282
          %vm472 = vcmp.ge.s32.totalorder %v345, %v283
          %vm473 = vcmp.ge.s32.totalorder %v346, %v282
          %vm474 = vcmp.ge.s32.totalorder %v346, %v283
          %v475 = vsel %vm347, 1, 0
          %v476 = vsel %vm348, 1, 0
          %v477 = vsel %vm349, 1, 0
          %v478 = vsel %vm350, 1, 0
          %v479 = vsel %vm351, 1, 0
          %v480 = vsel %vm352, 1, 0
          %v481 = vsel %vm353, 1, 0
          %v482 = vsel %vm354, 1, 0
          %v483 = vsel %vm355, 1, 0
          %v484 = vsel %vm356, 1, 0
          %v485 = vsel %vm357, 1, 0
          %v486 = vsel %vm358, 1, 0
          %v487 = vsel %vm359, 1, 0
          %v488 = vsel %vm360, 1, 0
          %v489 = vsel %vm361, 1, 0
          %v490 = vsel %vm362, 1, 0
          %v491 = vsel %vm363, 1, 0
          %v492 = vsel %vm364, 1, 0
          %v493 = vsel %vm365, 1, 0
          %v494 = vsel %vm366, 1, 0
          %v495 = vsel %vm367, 1, 0
          %v496 = vsel %vm368, 1, 0
          %v497 = vsel %vm369, 1, 0
          %v498 = vsel %vm370, 1, 0
          %v499 = vsel %vm371, 1, 0
          %v500 = vsel %vm372, 1, 0
          %v501 = vsel %vm373, 1, 0
          %v502 = vsel %vm374, 1, 0
          %v503 = vsel %vm375, 1, 0
          %v504 = vsel %vm376, 1, 0
          %v505 = vsel %vm377, 1, 0
          %v506 = vsel %vm378, 1, 0
          %v507 = vsel %vm379, 1, 0
          %v508 = vsel %vm380, 1, 0
          %v509 = vsel %vm381, 1, 0
          %v510 = vsel %vm382, 1, 0
          %v511 = vsel %vm383, 1, 0
          %v512 = vsel %vm384, 1, 0
          %v513 = vsel %vm385, 1, 0
          %v514 = vsel %vm386, 1, 0
          %v515 = vsel %vm387, 1, 0
          %v516 = vsel %vm388, 1, 0
          %v517 = vsel %vm389, 1, 0
          %v518 = vsel %vm390, 1, 0
          %v519 = vsel %vm391, 1, 0
          %v520 = vsel %vm392, 1, 0
          %v521 = vsel %vm393, 1, 0
          %v522 = vsel %vm394, 1, 0
          %v523 = vsel %vm395, 1, 0
          %v524 = vsel %vm396, 1, 0
          %v525 = vsel %vm397, 1, 0
          %v526 = vsel %vm398, 1, 0
          %v527 = vsel %vm399, 1, 0
          %v528 = vsel %vm400, 1, 0
          %v529 = vsel %vm401, 1, 0
          %v530 = vsel %vm402, 1, 0
          %v531 = vsel %vm403, 1, 0
          %v532 = vsel %vm404, 1, 0
          %v533 = vsel %vm405, 1, 0
          %v534 = vsel %vm406, 1, 0
          %v535 = vsel %vm407, 1, 0
          %v536 = vsel %vm408, 1, 0
          %v537 = vsel %vm409, 1, 0
          %v538 = vsel %vm410, 1, 0
          %v539 = vsel %vm411, 1, 0
          %v540 = vsel %vm412, 1, 0
          %v541 = vsel %vm413, 1, 0
          %v542 = vsel %vm414, 1, 0
          %v543 = vsel %vm415, 1, 0
          %v544 = vsel %vm416, 1, 0
          %v545 = vsel %vm417, 1, 0
          %v546 = vsel %vm418, 1, 0
          %v547 = vsel %vm419, 1, 0
          %v548 = vsel %vm420, 1, 0
          %v549 = vsel %vm421, 1, 0
          %v550 = vsel %vm422, 1, 0
          %v551 = vsel %vm423, 1, 0
          %v552 = vsel %vm424, 1, 0
          %v553 = vsel %vm425, 1, 0
          %v554 = vsel %vm426, 1, 0
          %v555 = vsel %vm427, 1, 0
          %v556 = vsel %vm428, 1, 0
          %v557 = vsel %vm429, 1, 0
          %v558 = vsel %vm430, 1, 0
          %v559 = vsel %vm431, 1, 0
          %v560 = vsel %vm432, 1, 0
          %v561 = vsel %vm433, 1, 0
          %v562 = vsel %vm434, 1, 0
          %v563 = vsel %vm435, 1, 0
          %v564 = vsel %vm436, 1, 0
          %v565 = vsel %vm437, 1, 0
          %v566 = vsel %vm438, 1, 0
          %v567 = vsel %vm439, 1, 0
          %v568 = vsel %vm440, 1, 0
          %v569 = vsel %vm441, 1, 0
          %v570 = vsel %vm442, 1, 0
          %v571 = vsel %vm443, 1, 0
          %v572 = vsel %vm444, 1, 0
          %v573 = vsel %vm445, 1, 0
          %v574 = vsel %vm446, 1, 0
          %v575 = vsel %vm447, 1, 0
          %v576 = vsel %vm448, 1, 0
          %v577 = vsel %vm449, 1, 0
          %v578 = vsel %vm450, 1, 0
          %v579 = vsel %vm451, 1, 0
          %v580 = vsel %vm452, 1, 0
          %v581 = vsel %vm453, 1, 0
          %v582 = vsel %vm454, 1, 0
          %v583 = vsel %vm455, 1, 0
          %v584 = vsel %vm456, 1, 0
          %v585 = vsel %vm457, 1, 0
          %v586 = vsel %vm458, 1, 0
          %v587 = vsel %vm459, 1, 0
          %v588 = vsel %vm460, 1, 0
          %v589 = vsel %vm461, 1, 0
          %v590 = vsel %vm462, 1, 0
          %v591 = vsel %vm463, 1, 0
          %v592 = vsel %vm464, 1, 0
          %v593 = vsel %vm465, 1, 0
          %v594 = vsel %vm466, 1, 0
          %v595 = vsel %vm467, 1, 0
          %v596 = vsel %vm468, 1, 0
          %v597 = vsel %vm469, 1, 0
          %v598 = vsel %vm470, 1, 0
          %v599 = vsel %vm471, 1, 0
          %v600 = vsel %vm472, 1, 0
          %v601 = vsel %vm473, 1, 0
          %v602 = vsel %vm474, 1, 0
          %v603 = vcvt.s32.f32 %v475
          %v604 = vcvt.s32.f32 %v476
          %v605 = vcvt.s32.f32 %v477
          %v606 = vcvt.s32.f32 %v478
          %v607 = vcvt.s32.f32 %v479
          %v608 = vcvt.s32.f32 %v480
          %v609 = vcvt.s32.f32 %v481
          %v610 = vcvt.s32.f32 %v482
          %v611 = vcvt.s32.f32 %v483
          %v612 = vcvt.s32.f32 %v484
          %v613 = vcvt.s32.f32 %v485
          %v614 = vcvt.s32.f32 %v486
          %v615 = vcvt.s32.f32 %v487
          %v616 = vcvt.s32.f32 %v488
          %v617 = vcvt.s32.f32 %v489
          %v618 = vcvt.s32.f32 %v490
          %v619 = vcvt.s32.f32 %v491
          %v620 = vcvt.s32.f32 %v492
          %v621 = vcvt.s32.f32 %v493
          %v622 = vcvt.s32.f32 %v494
          %v623 = vcvt.s32.f32 %v495
          %v624 = vcvt.s32.f32 %v496
          %v625 = vcvt.s32.f32 %v497
          %v626 = vcvt.s32.f32 %v498
          %v627 = vcvt.s32.f32 %v499
          %v628 = vcvt.s32.f32 %v500
          %v629 = vcvt.s32.f32 %v501
          %v630 = vcvt.s32.f32 %v502
          %v631 = vcvt.s32.f32 %v503
          %v632 = vcvt.s32.f32 %v504
          %v633 = vcvt.s32.f32 %v505
          %v634 = vcvt.s32.f32 %v506
          %v635 = vcvt.s32.f32 %v507
          %v636 = vcvt.s32.f32 %v508
          %v637 = vcvt.s32.f32 %v509
          %v638 = vcvt.s32.f32 %v510
          %v639 = vcvt.s32.f32 %v511
          %v640 = vcvt.s32.f32 %v512
          %v641 = vcvt.s32.f32 %v513
          %v642 = vcvt.s32.f32 %v514
          %v643 = vcvt.s32.f32 %v515
          %v644 = vcvt.s32.f32 %v516
          %v645 = vcvt.s32.f32 %v517
          %v646 = vcvt.s32.f32 %v518
          %v647 = vcvt.s32.f32 %v519
          %v648 = vcvt.s32.f32 %v520
          %v649 = vcvt.s32.f32 %v521
          %v650 = vcvt.s32.f32 %v522
          %v651 = vcvt.s32.f32 %v523
          %v652 = vcvt.s32.f32 %v524
          %v653 = vcvt.s32.f32 %v525
          %v654 = vcvt.s32.f32 %v526
          %v655 = vcvt.s32.f32 %v527
          %v656 = vcvt.s32.f32 %v528
          %v657 = vcvt.s32.f32 %v529
          %v658 = vcvt.s32.f32 %v530
          %v659 = vcvt.s32.f32 %v531
          %v660 = vcvt.s32.f32 %v532
          %v661 = vcvt.s32.f32 %v533
          %v662 = vcvt.s32.f32 %v534
          %v663 = vcvt.s32.f32 %v535
          %v664 = vcvt.s32.f32 %v536
          %v665 = vcvt.s32.f32 %v537
          %v666 = vcvt.s32.f32 %v538
          %v667 = vcvt.s32.f32 %v539
          %v668 = vcvt.s32.f32 %v540
          %v669 = vcvt.s32.f32 %v541
          %v670 = vcvt.s32.f32 %v542
          %v671 = vcvt.s32.f32 %v543
          %v672 = vcvt.s32.f32 %v544
          %v673 = vcvt.s32.f32 %v545
          %v674 = vcvt.s32.f32 %v546
          %v675 = vcvt.s32.f32 %v547
          %v676 = vcvt.s32.f32 %v548
          %v677 = vcvt.s32.f32 %v549
          %v678 = vcvt.s32.f32 %v550
          %v679 = vcvt.s32.f32 %v551
          %v680 = vcvt.s32.f32 %v552
          %v681 = vcvt.s32.f32 %v553
          %v682 = vcvt.s32.f32 %v554
          %v683 = vcvt.s32.f32 %v555
          %v684 = vcvt.s32.f32 %v556
          %v685 = vcvt.s32.f32 %v557
          %v686 = vcvt.s32.f32 %v558
          %v687 = vcvt.s32.f32 %v559
          %v688 = vcvt.s32.f32 %v560
          %v689 = vcvt.s32.f32 %v561
          %v690 = vcvt.s32.f32 %v562
          %v691 = vcvt.s32.f32 %v563
          %v692 = vcvt.s32.f32 %v564
          %v693 = vcvt.s32.f32 %v565
          %v694 = vcvt.s32.f32 %v566
          %v695 = vcvt.s32.f32 %v567
          %v696 = vcvt.s32.f32 %v568
          %v697 = vcvt.s32.f32 %v569
          %v698 = vcvt.s32.f32 %v570
          %v699 = vcvt.s32.f32 %v571
          %v700 = vcvt.s32.f32 %v572
          %v701 = vcvt.s32.f32 %v573
          %v702 = vcvt.s32.f32 %v574
          %v703 = vcvt.s32.f32 %v575
          %v704 = vcvt.s32.f32 %v576
          %v705 = vcvt.s32.f32 %v577
          %v706 = vcvt.s32.f32 %v578
          %v707 = vcvt.s32.f32 %v579
          %v708 = vcvt.s32.f32 %v580
          %v709 = vcvt.s32.f32 %v581
          %v710 = vcvt.s32.f32 %v582
          %v711 = vcvt.s32.f32 %v583
          %v712 = vcvt.s32.f32 %v584
          %v713 = vcvt.s32.f32 %v585
          %v714 = vcvt.s32.f32 %v586
          %v715 = vcvt.s32.f32 %v587
          %v716 = vcvt.s32.f32 %v588
          %v717 = vcvt.s32.f32 %v589
          %v718 = vcvt.s32.f32 %v590
          %v719 = vcvt.s32.f32 %v591
          %v720 = vcvt.s32.f32 %v592
          %v721 = vcvt.s32.f32 %v593
          %v722 = vcvt.s32.f32 %v594
          %v723 = vcvt.s32.f32 %v595
          %v724 = vcvt.s32.f32 %v596
          %v725 = vcvt.s32.f32 %v597
          %v726 = vcvt.s32.f32 %v598
          %v727 = vcvt.s32.f32 %v599
          %v728 = vcvt.s32.f32 %v600
          %v729 = vcvt.s32.f32 %v601
          %v730 = vcvt.s32.f32 %v602
          %p731 = scmp.eq.s32.totalorder %s25, 0
          // Predicated region
          $region33: #{tpu_custom_call.1} parent=31 // pred_check
            %p732 = pneg %p731
          $region34: #{tpu_custom_call.1} parent=31 // pred_check_branch
            %734 = sbr.rel (%p732) target = $region36
          $region35: #{tpu_custom_call.1} parent=31 // pred_region
            %735 = vst [vmem:[#allocation2] sm:$0xff] 0.0
            %736 = vst [vmem:[#allocation2 + $0x8] sm:$0xff] 0.0
          $region36: #{tpu_custom_call.1} parent=31 // pred_fallthru
            _
          %v737 = vld [vmem:[#allocation2] sm:$0xff]
          %v738 = vld [vmem:[#allocation2 + $0x8] sm:$0xff]
          %739 = vmatpush.xpose.msra.mxu0 %v633
          %740 = vmatpush.xpose.msra.mxu0 %v631
          %741 = vmatpush.xpose.msra.mxu0 %v629
          %742 = vmatpush.xpose.msra.mxu0 %v627
          %743 = vmatpush.xpose.msra.mxu0 %v625
          %744 = vmatpush.xpose.msra.mxu0 %v623
          %745 = vmatpush.xpose.msra.mxu0 %v621
          %746 = vmatpush.xpose.msra.mxu0 %v619
          %747 = vmatpush.xpose.msra.mxu0 %v617
          %748 = vmatpush.xpose.msra.mxu0 %v615
          %749 = vmatpush.xpose.msra.mxu0 %v613
          %750 = vmatpush.xpose.msra.mxu0 %v611
          %751 = vmatpush.xpose.msra.mxu0 %v609
          %752 = vmatpush.xpose.msra.mxu0 %v607
          %753 = vmatpush.xpose.msra.mxu0 %v605
          %754 = vmatpush.xpose.msra.mxu0 %v603
          %755 = vmatmul.f32.gmra.mxu0 %v272
          %v756 = vpop.f32.mrf.mxu0
          %v757 = vadd.f32 0.0, %v756
          %758 = vdwg.mxu0
          %759 = vmatpush.xpose.msra.mxu0 %v634
          %760 = vmatpush.xpose.msra.mxu0 %v632
          %761 = vmatpush.xpose.msra.mxu0 %v630
          %762 = vmatpush.xpose.msra.mxu0 %v628
          %763 = vmatpush.xpose.msra.mxu0 %v626
          %764 = vmatpush.xpose.msra.mxu0 %v624
          %765 = vmatpush.xpose.msra.mxu0 %v622
          %766 = vmatpush.xpose.msra.mxu0 %v620
          %767 = vmatpush.xpose.msra.mxu0 %v618
          %768 = vmatpush.xpose.msra.mxu0 %v616
          %769 = vmatpush.xpose.msra.mxu0 %v614
          %770 = vmatpush.xpose.msra.mxu0 %v612
          %771 = vmatpush.xpose.msra.mxu0 %v610
          %772 = vmatpush.xpose.msra.mxu0 %v608
          %773 = vmatpush.xpose.msra.mxu0 %v606
          %774 = vmatpush.xpose.msra.mxu0 %v604
          %775 = vmatmul.f32.gmra.mxu0 %v273
          %v776 = vpop.f32.mrf.mxu0
          %v777 = vadd.f32 %v757, %v776
          %778 = vdwg.mxu0
          %779 = vmatpush.xpose.msra.mxu0 %v665
          %780 = vmatpush.xpose.msra.mxu0 %v663
          %781 = vmatpush.xpose.msra.mxu0 %v661
          %782 = vmatpush.xpose.msra.mxu0 %v659
          %783 = vmatpush.xpose.msra.mxu0 %v657
          %784 = vmatpush.xpose.msra.mxu0 %v655
          %785 = vmatpush.xpose.msra.mxu0 %v653
          %786 = vmatpush.xpose.msra.mxu0 %v651
          %787 = vmatpush.xpose.msra.mxu0 %v649
          %788 = vmatpush.xpose.msra.mxu0 %v647
          %789 = vmatpush.xpose.msra.mxu0 %v645
          %790 = vmatpush.xpose.msra.mxu0 %v643
          %791 = vmatpush.xpose.msra.mxu0 %v641
          %792 = vmatpush.xpose.msra.mxu0 %v639
          %793 = vmatpush.xpose.msra.mxu0 %v637
          %794 = vmatpush.xpose.msra.mxu0 %v635
          %795 = vmatmul.f32.gmra.mxu0 %v272
          %v796 = vpop.f32.mrf.mxu0
          %v797 = vadd.f32 0.0, %v796
          %798 = vdwg.mxu0
          %799 = vmatpush.xpose.msra.mxu0 %v666
          %800 = vmatpush.xpose.msra.mxu0 %v664
          %801 = vmatpush.xpose.msra.mxu0 %v662
          %802 = vmatpush.xpose.msra.mxu0 %v660
          %803 = vmatpush.xpose.msra.mxu0 %v658
          %804 = vmatpush.xpose.msra.mxu0 %v656
          %805 = vmatpush.xpose.msra.mxu0 %v654
          %806 = vmatpush.xpose.msra.mxu0 %v652
          %807 = vmatpush.xpose.msra.mxu0 %v650
          %808 = vmatpush.xpose.msra.mxu0 %v648
          %809 = vmatpush.xpose.msra.mxu0 %v646
          %810 = vmatpush.xpose.msra.mxu0 %v644
          %811 = vmatpush.xpose.msra.mxu0 %v642
          %812 = vmatpush.xpose.msra.mxu0 %v640
          %813 = vmatpush.xpose.msra.mxu0 %v638
          %814 = vmatpush.xpose.msra.mxu0 %v636
          %815 = vmatmul.f32.gmra.mxu0 %v273
          %v816 = vpop.f32.mrf.mxu0
          %v817 = vadd.f32 %v797, %v816
          %818 = vdwg.mxu0
          %819 = vmatpush.xpose.msra.mxu0 %v697
          %820 = vmatpush.xpose.msra.mxu0 %v695
          %821 = vmatpush.xpose.msra.mxu0 %v693
          %822 = vmatpush.xpose.msra.mxu0 %v691
          %823 = vmatpush.xpose.msra.mxu0 %v689
          %824 = vmatpush.xpose.msra.mxu0 %v687
          %825 = vmatpush.xpose.msra.mxu0 %v685
          %826 = vmatpush.xpose.msra.mxu0 %v683
          %827 = vmatpush.xpose.msra.mxu0 %v681
          %828 = vmatpush.xpose.msra.mxu0 %v679
          %829 = vmatpush.xpose.msra.mxu0 %v677
          %830 = vmatpush.xpose.msra.mxu0 %v675
          %831 = vmatpush.xpose.msra.mxu0 %v673
          %832 = vmatpush.xpose.msra.mxu0 %v671
          %833 = vmatpush.xpose.msra.mxu0 %v669
          %834 = vmatpush.xpose.msra.mxu0 %v667
          %835 = vmatmul.f32.gmra.mxu0 %v272
          %v836 = vpop.f32.mrf.mxu0
          %v837 = vadd.f32 0.0, %v836
          %838 = vdwg.mxu0
          %839 = vmatpush.xpose.msra.mxu0 %v698
          %840 = vmatpush.xpose.msra.mxu0 %v696
          %841 = vmatpush.xpose.msra.mxu0 %v694
          %842 = vmatpush.xpose.msra.mxu0 %v692
          %843 = vmatpush.xpose.msra.mxu0 %v690
          %844 = vmatpush.xpose.msra.mxu0 %v688
          %845 = vmatpush.xpose.msra.mxu0 %v686
          %846 = vmatpush.xpose.msra.mxu0 %v684
          %847 = vmatpush.xpose.msra.mxu0 %v682
          %848 = vmatpush.xpose.msra.mxu0 %v680
          %849 = vmatpush.xpose.msra.mxu0 %v678
          %850 = vmatpush.xpose.msra.mxu0 %v676
          %851 = vmatpush.xpose.msra.mxu0 %v674
          %852 = vmatpush.xpose.msra.mxu0 %v672
          %853 = vmatpush.xpose.msra.mxu0 %v670
          %854 = vmatpush.xpose.msra.mxu0 %v668
          %855 = vmatmul.f32.gmra.mxu0 %v273
          %v856 = vpop.f32.mrf.mxu0
          %v857 = vadd.f32 %v837, %v856
          %858 = vdwg.mxu0
          %859 = vmatpush.xpose.msra.mxu0 %v729
          %860 = vmatpush.xpose.msra.mxu0 %v727
          %861 = vmatpush.xpose.msra.mxu0 %v725
          %862 = vmatpush.xpose.msra.mxu0 %v723
          %863 = vmatpush.xpose.msra.mxu0 %v721
          %864 = vmatpush.xpose.msra.mxu0 %v719
          %865 = vmatpush.xpose.msra.mxu0 %v717
          %866 = vmatpush.xpose.msra.mxu0 %v715
          %867 = vmatpush.xpose.msra.mxu0 %v713
          %868 = vmatpush.xpose.msra.mxu0 %v711
          %869 = vmatpush.xpose.msra.mxu0 %v709
          %870 = vmatpush.xpose.msra.mxu0 %v707
          %871 = vmatpush.xpose.msra.mxu0 %v705
          %872 = vmatpush.xpose.msra.mxu0 %v703
          %873 = vmatpush.xpose.msra.mxu0 %v701
          %874 = vmatpush.xpose.msra.mxu0 %v699
          %875 = vmatmul.f32.gmra.mxu0 %v272
          %v876 = vpop.f32.mrf.mxu0
          %v877 = vadd.f32 0.0, %v876
          %878 = vdwg.mxu0
          %879 = vmatpush.xpose.msra.mxu0 %v730
          %880 = vmatpush.xpose.msra.mxu0 %v728
          %881 = vmatpush.xpose.msra.mxu0 %v726
          %882 = vmatpush.xpose.msra.mxu0 %v724
          %883 = vmatpush.xpose.msra.mxu0 %v722
          %884 = vmatpush.xpose.msra.mxu0 %v720
          %885 = vmatpush.xpose.msra.mxu0 %v718
          %886 = vmatpush.xpose.msra.mxu0 %v716
          %887 = vmatpush.xpose.msra.mxu0 %v714
          %888 = vmatpush.xpose.msra.mxu0 %v712
          %889 = vmatpush.xpose.msra.mxu0 %v710
          %890 = vmatpush.xpose.msra.mxu0 %v708
          %891 = vmatpush.xpose.msra.mxu0 %v706
          %892 = vmatpush.xpose.msra.mxu0 %v704
          %893 = vmatpush.xpose.msra.mxu0 %v702
          %894 = vmatpush.xpose.msra.mxu0 %v700
          %895 = vmatmul.f32.gmra.mxu0 %v273
          %v896 = vpop.f32.mrf.mxu0
          %v897 = vadd.f32 %v877, %v896
          %898 = vdwg.mxu0
          %v903 = vrot.slane %v817, 4
          %v904 = vrot.slane %v897, 4
          %v905 = vsel %vm179, %v777, %v903
          %v906 = vsel %vm179, %v857, %v904
          %v909 = vadd.f32 %v737, %v905
          %v910 = vadd.f32 %v738, %v906
          %911 = vst [vmem:[#allocation2] sm:$0xff] %v909
          %912 = vst [vmem:[#allocation2 + $0x8] sm:$0xff] %v910
        $region32: #{tpu_custom_call.1} parent=23 // pred_fallthru
          _
        %p913 = scmp.eq.s32.totalorder %s24, 1
        %p914 = scmp.eq.s32.totalorder %s25, 0
        %p915 = pnand %p913, %p914
        %p916 = pneg %p915
        // Predicated region
        $region37: #{tpu_custom_call.1} parent=23 // pred_check
          _
        $region38: #{tpu_custom_call.1} parent=23 // pred_check_branch
          %918 = sbr.rel (%p915) target = $region40
        $region39: #{tpu_custom_call.1} parent=23 // pred_region
          %v919 = vld [vmem:[#allocation2] sm:$0xff]
          %v920 = vld [vmem:[#allocation2 + $0x8] sm:$0xff]
          %922 = vrot.lane.b32.xlu0 %v920, 1
          %v923 = vpop.permute.xlu0 %922
          %v924 = vrot.slane %v923, 4
          %v926 = vmul.f32 %v924, 0.66
          %v927 = vfloor.f32 %v926
          %v928 = vlaneseq
          %v929 = vand.u32 %v928, 127
          %v930 = vadd.s32 %v929, 128
          %v931 = vadd.s32 %v929, 256
          %v932 = vadd.s32 %v929, 384
          %v933 = vcvt.s32.f32 %v929
          %v934 = vcvt.s32.f32 %v930
          %v935 = vcvt.s32.f32 %v931
          %v936 = vcvt.s32.f32 %v932
          %938 = vset.pattern.permute.xlu0 0
          %939 = vperm.xlu0 %938, %v927
          %v940 = vpop.permute.xlu0 %939
          %v943 = vunpack.c.l.s4 839922192
          %v944 = vunpack.c.0.s8 %v943
          %v945 = vperm.slane %v940, %v944
          %vm946 = vcmp.ge.f32.partialorder %v919, %v945
          %vm947 = vcmp.ge.f32.partialorder %v920, %v945
          %v952 = vrot.slane %v934, 4
          %v953 = vrot.slane %v936, 4
          %vm954 = vcmask 1043456
          %v955 = vsel %vm954, %v933, %v952
          %v956 = vsel %vm954, %v935, %v953
          %v959 = vsel %vm946, %v955, 512.0
          %v960 = vsel %vm947, %v956, 512.0
          %963 = vst [vmem:[#allocation1] ss:$2 sm:$0xff] %v959
          %s964 = scalar_lea.vmem [#allocation1], 16
          %965 = vst [vmem:[%s964] ss:$2 sm:$0xff] %v960
          %v966 = vld.sshfl [vmem:[#allocation1] sm:$0xff pattern:$0x75316420]
          %v967 = vld.sshfl [vmem:[#allocation1 + $0x8] sm:$0xff pattern:$0x75316420]
          %v968 = vld.sshfl [vmem:[#allocation1 + $0x10] sm:$0xff pattern:$0x75316420]
          %v969 = vld.sshfl [vmem:[#allocation1 + $0x18] sm:$0xff pattern:$0x75316420]
          %v974 = vsel %vm954, %v966, inf
          %v975 = vsel %vm954, %v967, inf
          %v976 = vsel %vm954, %v968, inf
          %v977 = vsel %vm954, %v969, inf
          %v978 = vmin.f32 %v974, %v975
          %v979 = vmin.f32 %v976, %v977
          %v980 = vmin.f32 %v978, %v979
          %981 = vmin.xlane.f32.xlu0 %v980
          %v982 = vpop.xlane.xlu0 %981
          %v983 = vsub.f32 %v982, 1.0
          %vm984 = vcmp.eq.f32.partialorder %v933, %v983
          %vm985 = vcmp.eq.f32.partialorder %v934, %v983
          %vm986 = vcmp.eq.f32.partialorder %v935, %v983
          %vm987 = vcmp.eq.f32.partialorder %v936, %v983
          %989 = vst [vmem:[#allocation1] ss:$2 sm:$0xff] %v919
          %s990 = scalar_lea.vmem [#allocation1], 16
          %991 = vst [vmem:[%s990] ss:$2 sm:$0xff] %v920
          %v992 = vld.sshfl [vmem:[#allocation1] sm:$0xff pattern:$0x75316420]
          %v993 = vld.sshfl [vmem:[#allocation1 + $0x8] sm:$0xff pattern:$0x75316420]
          %v994 = vld.sshfl [vmem:[#allocation1 + $0x10] sm:$0xff pattern:$0x75316420]
          %v995 = vld.sshfl [vmem:[#allocation1 + $0x18] sm:$0xff pattern:$0x75316420]
          %v1000 = vsel %vm984, %v992, 0.0
          %v1001 = vsel %vm985, %v993, 0.0
          %v1002 = vsel %vm986, %v994, 0.0
          %v1003 = vsel %vm987, %v995, 0.0
          %v1004 = vsel %vm954, %v1000, 0.0
          %v1005 = vsel %vm954, %v1001, 0.0
          %v1006 = vadd.f32 %v1004, %v1005
          %v1007 = vsel %vm954, %v1002, 0.0
          %v1008 = vadd.f32 %v1006, %v1007
          %v1009 = vsel %vm954, %v1003, 0.0
          %v1010 = vadd.f32 %v1008, %v1009
          %1011 = vadd.xlane.f32.xlu0 %v1010
          %v1012 = vpop.xlane.xlu0 %1011
          %vm1013 = vcmask 3072
          %1014 = vst.msk [vmem:[#allocation3] sm:$0xf] %vm1013, %v982
          %v1015 = vsub.f32 %v927, %v1012
          %1016 = vst.msk [vmem:[#allocation4] sm:$0xf] %vm1013, %v1015
          %1017 = vst.msk [vmem:[#allocation5] sm:$0xf] %vm1013, 0.0
        $region40: #{tpu_custom_call.1} parent=23 // pred_fallthru
          _
        // Predicated region
        $region41: #{tpu_custom_call.1} parent=23 // pred_check
          %p1018 = pneg %p913
        $region42: #{tpu_custom_call.1} parent=23 // pred_check_branch
          %1020 = sbr.rel (%p1018) target = $region44
        $region43: #{tpu_custom_call.1} parent=23 // pred_region
          %s1021 = smul.u32 %s25, 2
          %s1022 = scalar_lea.vmem [#allocation6], %s1021
          %v1023 = vld [vmem:[%s1022] sm:$0x3]
          %s1024 = scalar_lea.vmem [#allocation7], %s1021
          %v1025 = vld [vmem:[%s1024] sm:$0x3]
          %v1026 = vlog2.pop %v1023
          %v1027 = vmul.f32 %v1026, 0.6931472
          %vm1028 = vcmp.lt.f32.partialorder %v1023, 1.1111112
          %v1029 = vperm.slane %v1025, 0
          %v1030 = vperm.slane %v1025, 1
          %vm1031 = vcmp.eq.s32.totalorder %v167, %v1029
          %vm1032 = vcmp.eq.s32.totalorder %v167, %v1030
          %v1033 = vsel %vm1031, 1, 0
          %v1034 = vsel %vm1032, 1, 0
          %v1035 = vcvt.s32.f32 %v1033
          %v1036 = vcvt.s32.f32 %v1034
          %v1037 = vsub.f32 %v1023, 1.0
          %v1038 = vmul.f32 %v1037, 170.66667
          %v1039 = vmax.f32 %v1038, 0.0
          %v1040 = vmin.f32 %v1039, 511.0
          %v1041 = vcvt.f32.s32.to.zero.pseudo %v1040
          %v1042 = vcvt.s32.f32 %v1041
          %v1043 = vld [vmem:[#allocation3] sm:$0xf]
          %1045 = vset.pattern.permute.xlu0 0
          %1046 = vperm.xlu0 %1045, %v1043
          %v1047 = vpop.permute.xlu0 %1046
          %v1049 = vmul.f32 %v1035, %v1047
          %v1050 = vmul.f32 %v1036, %v1047
          %vm1051 = vcmask 1043456
          %v1052 = vsel %vm1051, %v1049, 0.0
          %v1053 = vrot.slane %v1052, 4
          %v1054 = vadd.f32 %v1052, %v1053
          %v1055 = vrot.slane %v1054, 2
          %v1056 = vadd.f32 %v1054, %v1055
          %v1057 = vrot.slane %v1056, 1
          %v1058 = vadd.f32 %v1056, %v1057
          %v1059 = vsel %vm1051, %v1050, 0.0
          %v1060 = vrot.slane %v1059, 4
          %v1061 = vadd.f32 %v1059, %v1060
          %v1062 = vrot.slane %v1061, 2
          %v1063 = vadd.f32 %v1061, %v1062
          %v1064 = vrot.slane %v1063, 1
          %v1065 = vadd.f32 %v1063, %v1064
          %v1068 = vrot.slane %v1065, 7
          %vm1069 = vcmask 1040384
          %v1070 = vsel %vm1069, %v1058, %v1068
          %vm1072 = vcmp.lt.f32.partialorder %v1042, %v1070
          %vm1073 = vmor %vm1028, %vm1072
          %v1074 = vsel %vm1073, %v1027, 0.0
          %v1076 = vperm.slane %v1074, 0
          %v1077 = vperm.slane %v1074, 1
          %v1080 = vsel %vm1069, %v1076, 0.0
          %v1081 = vsel %vm1069, %v1077, 0.0
          %v1082 = vadd.f32 %v1080, %v1081
          %1083 = vadd.xlane.f32.xlu0 %v1082
          %v1084 = vpop.xlane.xlu0 %1083
          %vm1085 = vcmp.eq.f32.partialorder %v1042, %v1070
          %v1086 = vsel %vm1085, 1, 0
          %v1087 = vcvt.s32.f32 %v1086
          %v1089 = vperm.slane %v1087, 0
          %v1090 = vperm.slane %v1087, 1
          %v1093 = vmul.f32 %v1035, %v1089
          %v1094 = vmul.f32 %v1036, %v1090
          %v1095 = vadd.s32 %v167, 8
          %v1096 = vadd.s32 %v167, 16
          %v1097 = vadd.s32 %v167, 24
          %v1098 = vadd.s32 %v167, 32
          %v1099 = vadd.s32 %v167, 40
          %v1100 = vadd.s32 %v167, 48
          %v1101 = vadd.s32 %v167, 56
          %v1102 = vadd.s32 %v167, 64
          %v1103 = vadd.s32 %v167, 72
          %v1104 = vadd.s32 %v167, 80
          %v1105 = vadd.s32 %v167, 88
          %v1106 = vadd.s32 %v167, 96
          %v1107 = vadd.s32 %v167, 104
          %v1108 = vadd.s32 %v167, 112
          %v1109 = vadd.s32 %v167, 120
          %v1110 = vlaneseq
          %v1111 = vand.u32 %v1110, 127
          %vm1112 = vcmp.lt.s32.totalorder %v167, %v1111
          %vm1113 = vcmp.lt.s32.totalorder %v1095, %v1111
          %vm1114 = vcmp.lt.s32.totalorder %v1096, %v1111
          %vm1115 = vcmp.lt.s32.totalorder %v1097, %v1111
          %vm1116 = vcmp.lt.s32.totalorder %v1098, %v1111
          %vm1117 = vcmp.lt.s32.totalorder %v1099, %v1111
          %vm1118 = vcmp.lt.s32.totalorder %v1100, %v1111
          %vm1119 = vcmp.lt.s32.totalorder %v1101, %v1111
          %vm1120 = vcmp.lt.s32.totalorder %v1102, %v1111
          %vm1121 = vcmp.lt.s32.totalorder %v1103, %v1111
          %vm1122 = vcmp.lt.s32.totalorder %v1104, %v1111
          %vm1123 = vcmp.lt.s32.totalorder %v1105, %v1111
          %vm1124 = vcmp.lt.s32.totalorder %v1106, %v1111
          %vm1125 = vcmp.lt.s32.totalorder %v1107, %v1111
          %vm1126 = vcmp.lt.s32.totalorder %v1108, %v1111
          %vm1127 = vcmp.lt.s32.totalorder %v1109, %v1111
          %v1128 = vsel %vm1112, 1, 0
          %v1129 = vsel %vm1113, 1, 0
          %v1130 = vsel %vm1114, 1, 0
          %v1131 = vsel %vm1115, 1, 0
          %v1132 = vsel %vm1116, 1, 0
          %v1133 = vsel %vm1117, 1, 0
          %v1134 = vsel %vm1118, 1, 0
          %v1135 = vsel %vm1119, 1, 0
          %v1136 = vsel %vm1120, 1, 0
          %v1137 = vsel %vm1121, 1, 0
          %v1138 = vsel %vm1122, 1, 0
          %v1139 = vsel %vm1123, 1, 0
          %v1140 = vsel %vm1124, 1, 0
          %v1141 = vsel %vm1125, 1, 0
          %v1142 = vsel %vm1126, 1, 0
          %v1143 = vsel %vm1127, 1, 0
          %v1144 = vcvt.s32.f32 %v1128
          %v1145 = vcvt.s32.f32 %v1129
          %v1146 = vcvt.s32.f32 %v1130
          %v1147 = vcvt.s32.f32 %v1131
          %v1148 = vcvt.s32.f32 %v1132
          %v1149 = vcvt.s32.f32 %v1133
          %v1150 = vcvt.s32.f32 %v1134
          %v1151 = vcvt.s32.f32 %v1135
          %v1152 = vcvt.s32.f32 %v1136
          %v1153 = vcvt.s32.f32 %v1137
          %v1154 = vcvt.s32.f32 %v1138
          %v1155 = vcvt.s32.f32 %v1139
          %v1156 = vcvt.s32.f32 %v1140
          %v1157 = vcvt.s32.f32 %v1141
          %v1158 = vcvt.s32.f32 %v1142
          %v1159 = vcvt.s32.f32 %v1143
          %v1160 = vpack.c.bf16 %v1145, %v1144
          %v1161 = vpack.c.bf16 %v1147, %v1146
          %v1162 = vpack.c.bf16 %v1149, %v1148
          %v1163 = vpack.c.bf16 %v1151, %v1150
          %v1164 = vpack.c.bf16 %v1153, %v1152
          %v1165 = vpack.c.bf16 %v1155, %v1154
          %v1166 = vpack.c.bf16 %v1157, %v1156
          %v1167 = vpack.c.bf16 %v1159, %v1158
          %v1168 = vld [vmem:[#allocation5] sm:$0xf]
          %v1169 = vld [vmem:[#allocation4] sm:$0xf]
          %v1170 = vpack.c.bf16 %v1093, %v1093
          %1172 = vset.pattern.permute.xlu0 0
          %1173 = vperm.xlu0 %1172, %v1168
          %v1174 = vpop.permute.xlu0 %1173
          %1176 = vmatpush.bf16.msra.mxu0 %v1167
          %1177 = vmatpush.bf16.msra.mxu0 %v1166
          %1178 = vmatpush.bf16.msra.mxu0 %v1165
          %1179 = vmatpush.bf16.msra.mxu0 %v1164
          %1180 = vmatpush.bf16.msra.mxu0 %v1163
          %1181 = vmatpush.bf16.msra.mxu0 %v1162
          %1182 = vmatpush.bf16.msra.mxu0 %v1161
          %1183 = vmatpush.bf16.msra.mxu0 %v1160
          %1184 = vmatmul.bf16.gmra.mxu0 %v1170
          %v1185 = vpop.f32.mrf.mxu0
          %v1186 = vadd.f32 %v1174, %v1185
          %v1187 = vpop.f32.mrf.mxu0
          %1188 = vdwg.mxu0
          %1190 = vset.pattern.permute.xlu0 0
          %1191 = vperm.xlu0 %1190, %v1169
          %v1192 = vpop.permute.xlu0 %1191
          %vm1194 = vcmp.lt.f32.partialorder %v1186, %v1192
          %v1195 = vsel %vm1194, 1, 0
          %v1196 = vcvt.s32.f32 %v1195
          %v1197 = vmul.f32 %v1093, %v1196
          %v1198 = vsel %vm1051, %v1197, 0.0
          %v1199 = vrot.slane %v1198, 4
          %v1200 = vadd.f32 %v1198, %v1199
          %v1201 = vrot.slane %v1200, 2
          %v1202 = vadd.f32 %v1200, %v1201
          %v1203 = vrot.slane %v1202, 1
          %v1204 = vadd.f32 %v1202, %v1203
          %vm1205 = vcmp.gt.f32.partialorder %v1204, 0.0
          %vm1206 = vmxor %vm1073, 1
          %vm1207 = vmand %vm1205, %vm1206
          %v1208 = vsel %vm1207, %v1027, 0.0
          %v1209 = vsel %vm1069, %v1208, 0.0
          %1210 = vadd.xlane.f32.xlu0 %v1209
          %v1211 = vpop.xlane.xlu0 %1210
          %v1212 = vadd.f32 %v1084, %v1211
          %v1213 = vsel %vm1051, %v1093, 0.0
          %1214 = vadd.xlane.f32.xlu0 %v1213
          %v1215 = vpop.xlane.xlu0 %1214
          %v1216 = vadd.f32 %v1168, %v1215
          %v1217 = vpack.c.bf16 %v1094, %v1094
          %1219 = vset.pattern.permute.xlu0 0
          %1220 = vperm.xlu0 %1219, %v1216
          %v1221 = vpop.permute.xlu0 %1220
          %1223 = vmatpush.bf16.msra.mxu0 %v1167
          %1224 = vmatpush.bf16.msra.mxu0 %v1166
          %1225 = vmatpush.bf16.msra.mxu0 %v1165
          %1226 = vmatpush.bf16.msra.mxu0 %v1164
          %1227 = vmatpush.bf16.msra.mxu0 %v1163
          %1228 = vmatpush.bf16.msra.mxu0 %v1162
          %1229 = vmatpush.bf16.msra.mxu0 %v1161
          %1230 = vmatpush.bf16.msra.mxu0 %v1160
          %1231 = vmatmul.bf16.gmra.mxu0 %v1217
          %v1232 = vpop.f32.mrf.mxu0
          %v1233 = vadd.f32 %v1221, %v1232
          %v1234 = vpop.f32.mrf.mxu0
          %1235 = vdwg.mxu0
          %vm1236 = vcmp.lt.f32.partialorder %v1233, %v1192
          %v1237 = vsel %vm1236, 1, 0
          %v1238 = vcvt.s32.f32 %v1237
          %v1239 = vmul.f32 %v1094, %v1238
          %v1240 = vsel %vm1051, %v1239, 0.0
          %v1241 = vrot.slane %v1240, 4
          %v1242 = vadd.f32 %v1240, %v1241
          %v1243 = vrot.slane %v1242, 2
          %v1244 = vadd.f32 %v1242, %v1243
          %v1245 = vrot.slane %v1244, 1
          %v1246 = vadd.f32 %v1244, %v1245
          %vm1247 = vcmp.gt.f32.partialorder %v1246, 0.0
          %v1248 = vsel %vm1073, 1, 0
          %v1249 = vrot.slane %v1248, 1
          %vm1250 = vcmp.ne.s32.totalorder %v1249, 0
          %vm1251 = vmxor %vm1250, 1
          %vm1252 = vmand %vm1247, %vm1251
          %v1254 = vperm.slane %v1027, 1
          %v1256 = vsel %vm1252, %v1254, 0.0
          %v1257 = vsel %vm1069, %v1256, 0.0
          %1258 = vadd.xlane.f32.xlu0 %v1257
          %v1259 = vpop.xlane.xlu0 %1258
          %v1260 = vadd.f32 %v1212, %v1259
          %v1261 = vsel %vm1051, %v1094, 0.0
          %1262 = vadd.xlane.f32.xlu0 %v1261
          %v1263 = vpop.xlane.xlu0 %1262
          %v1264 = vadd.f32 %v1216, %v1263
          %vm1265 = vcmask 3072
          %1266 = vst.msk [vmem:[#allocation5] sm:$0xf] %vm1265, %v1264
          // Predicated region
          $region45: #{tpu_custom_call.1} parent=43 // pred_check
            %p1267 = pneg %p914
          $region46: #{tpu_custom_call.1} parent=43 // pred_check_branch
            %1269 = sbr.rel (%p1267) target = $region48
          $region47: #{tpu_custom_call.1} parent=43 // pred_region
            %vm1270 = vcmask 0
            %1271 = vst.msk [vmem:[#allocation8] sm:$0x1] %vm1270, 0.0
          $region48: #{tpu_custom_call.1} parent=43 // pred_fallthru
            _
          %v1272 = vld [vmem:[#allocation8] sm:$0x1]
          %v1273 = vadd.f32 %v1272, %v1260
          %vm1274 = vcmask 0
          %1275 = vst.msk [vmem:[#allocation8] sm:$0x1] %vm1274, %v1273
          // Predicated region
          $region49: #{tpu_custom_call.1} parent=43 // pred_check
            %p1276 = pneg %p914
          $region50: #{tpu_custom_call.1} parent=43 // pred_check_branch
            %1278 = sbr.rel (%p1276) target = $region52
          $region51: #{tpu_custom_call.1} parent=43 // pred_region
            %v1279 = vld [vmem:[#allocation8] sm:$0x1]
            %1281 = vset.pattern.permute.xlu0 0
            %1282 = vperm.xlu0 %1281, %v1279
            %v1283 = vpop.permute.xlu0 %1282
            %v1285 = vperm.slane %v1283, 0
            %1286 = vst [vmem:[%s162] sm:$0x1] %v1285
          $region52: #{tpu_custom_call.1} parent=43 // pred_fallthru
            _
        $region44: #{tpu_custom_call.1} parent=23 // pred_fallthru
          _
        %s1287 = sand.u32 %s77, 1
        %s1288 = scalar_lea.sflag [#allocation11], %s1287
        %s1289 = sand.u32 %s77, 1
        %s1290 = scalar_lea.vmem [#allocation12], %s1289
        // Predicated region
        $region53: #{tpu_custom_call.1} parent=23 // pred_check
          %p1291 = pneg %p87
        $region54: #{tpu_custom_call.1} parent=23 // pred_check_branch
          %1293 = sbr.rel (%p1291) target = $region56
        $region55: #{tpu_custom_call.1} parent=23 // pred_region
          %1295 = vsyncadd %s1288, 0
          %s1296 = scalar_lea.hbm %s1, %s23
          %s1298 = sshll.u32 %s1290, 4
          %s1299 = int_to_ptr.vmem [resolvable:$true] %s1298
          %s1300 = sshll.u32 %s1296, 4
          %s1301 = int_to_ptr.hbm [resolvable:$true] %s1300
          %1303 = dma.vmem_to_hbm [thread:$0]  %s1299, 16, %s1301, %s1288
        $region56: #{tpu_custom_call.1} parent=23 // pred_fallthru
          _
      $region24: #{tpu_custom_call.1} parent=5 // pred_fallthru
        _
      %p1304 = scmp.le.s32.totalorder 2, %s13
      // Predicated region
      $region57: #{tpu_custom_call.1} parent=5 // pred_check
        %p1305 = pneg %p1304
      $region58: #{tpu_custom_call.1} parent=5 // pred_check_branch
        %1307 = sbr.rel (%p1305) target = $region60
      $region59: #{tpu_custom_call.1} parent=5 // pred_region
        %s1308 = ssub.s32 %s13, 2
        // Predicated region
        $region61: #{tpu_custom_call.1} parent=59 // pred_check
          %p1309 = pneg %p93
        $region62: #{tpu_custom_call.1} parent=59 // pred_check_branch
          %1311 = sbr.rel (%p1309) target = $region64
        $region63: #{tpu_custom_call.1} parent=59 // pred_region
          %s1312 = sand.u32 %s78, 1
          %s1313 = scalar_lea.sflag [#allocation11], %s1312
          %s1314 = sand.u32 %s78, 1
          %s1315 = scalar_lea.vmem [#allocation12], %s1314
          %1317 = dma.done %s1313, 16
        $region64: #{tpu_custom_call.1} parent=59 // pred_fallthru
          _
      $region60: #{tpu_custom_call.1} parent=5 // pred_fallthru
        _
    $region6: #{tpu_custom_call.1} parent=1 // loop_footer
      %s17 = sadd.s32 1, %s13
    $region7: #{tpu_custom_call.1} parent=1 // loop_footer_branch
      %12 = sbr.rel target = $region3
    $region8: #{tpu_custom_call.1} parent=1 // loop_exit
      _
    %1318 = vsyncpa [#allocation10], 1
    %s1319 = scalar_lea.sflag [#allocation10], 1
    %1320 = vsyncpa %s1319, 1
    %1321 = vsyncpa [#allocation11], 1
    %s1322 = scalar_lea.sflag [#allocation11], 1
    %1323 = vsyncpa %s1322, 1

</llo_original>
